<compile_context>
chip_gen: v7x
topology: tpu7x:2x2x1
jax: 0.10.0
libtpu: 0.0.40
codegen_flags: <defaults>
</compile_context>

<pallas_src>
import functools
import math

import jax
import jax.numpy as jnp
from jax.experimental import pallas as pl
from jax.experimental.pallas import tpu as pltpu


def _skip_lstm_kernel(x_ref, wih_ref, whh_ref, b_ref, hn_ref, cn_ref,
                      gx_sc, h_sc, c_sc, *, T, S, HP, B_pad):
    """One time-chunk of the LSTM recurrence per grid step.

    x_ref   : (T*B_pad, I)     time-major flattened input chunk
    wih_ref : (I, 4*HP)        W_ih^T, gate columns in {i,f,o,g} lane slots
    whh_ref : (HP, 4*HP)       W_hh^T, rows/columns zero-padded
    b_ref   : (1, 4*HP)        b_ih + b_hh, padded
    hn_ref  : (B_pad, HP)      lane-dense final hidden state
    cn_ref  : (B_pad, HP)      lane-dense final cell state
    gx_sc   : (T*B_pad, 4*HP)  scratch for the hoisted input projection
    h_sc    : (B_pad, HP)      h carry, persistent across grid steps
    c_sc    : (B_pad, HP)      c carry, persistent across grid steps
    """
    chunk = pl.program_id(0)

    # ---- init carries at the first chunk ----
    @pl.when(chunk == 0)
    def _():
        h_sc[...] = jnp.zeros_like(h_sc)
        c_sc[...] = jnp.zeros_like(c_sc)

    # ---- prologue: input projection for the whole chunk in one MXU matmul ----
    gx_sc[...] = (jnp.dot(x_ref[...], wih_ref[...],
                          preferred_element_type=jnp.float32)
                  + b_ref[...])

    needs_mask = (S % T != 0)  # static: only the last chunk may be partial

    # ---- serial recurrence over this chunk (the only truly sequential part) ----
    def step(t, carry):
        h, c = carry                                             # (B_pad, HP)
        start = pl.multiple_of(t * B_pad, B_pad)                 # (8,·)-aligned
        gates = (gx_sc[pl.ds(start, B_pad), :]
                 + jnp.dot(h, whh_ref[...],
                           preferred_element_type=jnp.float32))  # (B_pad, 4*HP)
        # Gate slots reordered to {i, f, o, g}: one sigmoid over 3*HP lanes,
        # one tanh over HP lanes — both 128-lane-aligned slices.
        sig = jax.nn.sigmoid(gates[:, :3 * HP])
        i_g = sig[:, 0 * HP:1 * HP]
        f_g = sig[:, 1 * HP:2 * HP]
        o_g = sig[:, 2 * HP:3 * HP]
        g_g = jnp.tanh(gates[:, 3 * HP:4 * HP])
        c_new = f_g * c + i_g * g_g
        h_new = o_g * jnp.tanh(c_new)
        if needs_mask:
            valid = (chunk * T + t) < S
            h_new = jnp.where(valid, h_new, h)
            c_new = jnp.where(valid, c_new, c)
        return h_new, c_new

    h_fin, c_fin = jax.lax.fori_loop(0, T, step, (h_sc[...], c_sc[...]),
                                     unroll=True)
    h_sc[...] = h_fin
    c_sc[...] = c_fin

    # Lane-dense (8,128) stores; the output block index is constant across the
    # grid, so the HBM writeback happens once at the end with the final value.
    hn_ref[...] = h_fin
    cn_ref[...] = c_fin


def skip_lstm_forward(x, w_ih, w_hh, b_ih, b_hh, *, time_chunk=4):
    """x: (seq, batch, input_size).  Weights in PyTorch layout:
       w_ih: (4H, I), w_hh: (4H, H), b_ih/b_hh: (4H,).
       Returns (output, (h_n, c_n)) with shapes (1, B, H) each."""
    S, B, I = x.shape
    H4 = w_ih.shape[0]
    H = H4 // 4

    LANE, SUB = 128, 8
    HP = ((H + LANE - 1) // LANE) * LANE       # per-gate width, lane-aligned
    B_pad = ((B + SUB - 1) // SUB) * SUB       # batch rows, sublane-aligned

    T = min(time_chunk, S)                     # timesteps per grid step
    nchunks = (S + T - 1) // T
    S_pad = nchunks * T

    x = jnp.asarray(x, jnp.float32)
    w_ih = jnp.asarray(w_ih, jnp.float32)
    w_hh = jnp.asarray(w_hh, jnp.float32)
    b_sum = jnp.asarray(b_ih, jnp.float32) + jnp.asarray(b_hh, jnp.float32)

    # Layout plumbing (wrapper-side, no compute): transpose weights so the
    # kernel does plain (.,K)@(K,N) MXU matmuls, and scatter each gate's
    # columns into a 128-lane-aligned slot.  PyTorch gate order is (i,f,g,o);
    # destination slots are reordered to (i,f,o,g) so the sigmoid gates are
    # contiguous.
    GATE_SLOT = (0, 1, 3, 2)                   # src gate g -> dst slot

    def pad_gate_cols(w_t):                    # (K, 4H) -> (K, 4*HP)
        K = w_t.shape[0]
        wp = jnp.zeros((K, 4 * HP), jnp.float32)
        for g, slot in enumerate(GATE_SLOT):
            wp = wp.at[:, slot * HP:slot * HP + H].set(w_t[:, g * H:(g + 1) * H])
        return wp

    wih_p = pad_gate_cols(w_ih.T)                                 # (I, 4*HP)
    whh_p = jnp.zeros((HP, 4 * HP), jnp.float32)
    whh_p = whh_p.at[:H, :].set(pad_gate_cols(w_hh.T))            # (HP, 4*HP)
    b_p = pad_gate_cols(b_sum[None, :])                           # (1, 4*HP)

    # Time-major flatten with batch + time padding: row (t*B_pad + b).
    x_p = jnp.zeros((S_pad, B_pad, I), jnp.float32).at[:S, :B, :].set(x)
    x2d = x_p.reshape(S_pad * B_pad, I)

    kernel = functools.partial(_skip_lstm_kernel, T=T, S=S, HP=HP, B_pad=B_pad)

    h_pad, c_pad = pl.pallas_call(
        kernel,
        out_shape=(
            jax.ShapeDtypeStruct((B_pad, HP), jnp.float32),   # h_n (lane-dense)
            jax.ShapeDtypeStruct((B_pad, HP), jnp.float32),   # c_n (lane-dense)
        ),
        grid_spec=pltpu.PrefetchScalarGridSpec(
            num_scalar_prefetch=0,
            grid=(nchunks,),                                  # time chunks
            in_specs=[
                pl.BlockSpec((T * B_pad, I), lambda t: (t, 0)),    # x chunk
                pl.BlockSpec((I, 4 * HP), lambda t: (0, 0)),       # W_ih^T (invariant)
                pl.BlockSpec((HP, 4 * HP), lambda t: (0, 0)),      # W_hh^T (invariant)
                pl.BlockSpec((1, 4 * HP), lambda t: (0, 0)),       # b_ih + b_hh
            ],
            out_specs=[
                pl.BlockSpec((B_pad, HP), lambda t: (0, 0)),
                pl.BlockSpec((B_pad, HP), lambda t: (0, 0)),
            ],
            scratch_shapes=[
                pltpu.VMEM((T * B_pad, 4 * HP), jnp.float32),  # hoisted gates_x
                pltpu.VMEM((B_pad, HP), jnp.float32),          # h carry
                pltpu.VMEM((B_pad, HP), jnp.float32),          # c carry
            ],
        ),
        compiler_params=pltpu.CompilerParams(
            dimension_semantics=("arbitrary",),    # sequential recurrence
        ),
    )(x2d, wih_p, whh_p, b_p)

    # Strip the batch/lane padding in the wrapper (pure layout, no compute).
    h_n = h_pad[:B, :H][None]                                  # (1, B, H)
    c_n = c_pad[:B, :H][None]                                  # (1, B, H)
    # For a single-layer unidirectional LSTM the last-step output IS h_n.
    return h_n, (h_n, c_n)


def _reference_lstm(x, w_ih, w_hh, b_ih, b_hh):
    """Pure-JAX reference of the same forward, for a sanity check."""
    S, B, I = x.shape
    H = w_hh.shape[1]
    h = jnp.zeros((B, H), jnp.float32)
    c = jnp.zeros((B, H), jnp.float32)
    for t in range(S):
        gates = x[t] @ w_ih.T + b_ih + h @ w_hh.T + b_hh
        i_g = jax.nn.sigmoid(gates[:, 0 * H:1 * H])
        f_g = jax.nn.sigmoid(gates[:, 1 * H:2 * H])
        g_g = jnp.tanh(gates[:, 2 * H:3 * H])
        o_g = jax.nn.sigmoid(gates[:, 3 * H:4 * H])
        c = f_g * c + i_g * g_g
        h = o_g * jnp.tanh(c)
    return h[None], (h[None], c[None])


if __name__ == "__main__":
    # SkipLSTM(input_size=16, hidden_size=32, num_layers=1, bias=True,
    #          batch_first=False, dropout=0.0, bidirectional=False)
    SEQ, BATCH, INPUT, HIDDEN = 8, 2, 16, 32

    key = jax.random.PRNGKey(0)
    k_x, k1, k2, k3, k4 = jax.random.split(key, 5)

    # Deterministic parameter init, PyTorch-style U(-1/sqrt(H), 1/sqrt(H)).
    bound = 1.0 / math.sqrt(HIDDEN)
    w_ih = jax.random.uniform(k1, (4 * HIDDEN, INPUT), jnp.float32, -bound, bound)
    w_hh = jax.random.uniform(k2, (4 * HIDDEN, HIDDEN), jnp.float32, -bound, bound)
    b_ih = jax.random.uniform(k3, (4 * HIDDEN,), jnp.float32, -bound, bound)
    b_hh = jax.random.uniform(k4, (4 * HIDDEN,), jnp.float32, -bound, bound)

    x = jax.random.normal(k_x, (SEQ, BATCH, INPUT), jnp.float32)

    out, (h_n, c_n) = skip_lstm_forward(x, w_ih, w_hh, b_ih, b_hh)
    jax.block_until_ready((out, h_n, c_n))

    # Cross-check against the pure-JAX reference.
    ref_out, (ref_h, ref_c) = _reference_lstm(x, w_ih, w_hh, b_ih, b_hh)
    assert out.shape == (1, BATCH, HIDDEN)
    assert h_n.shape == (1, BATCH, HIDDEN)
    assert c_n.shape == (1, BATCH, HIDDEN)
    assert jnp.allclose(out, ref_out, atol=1e-5)
    assert jnp.allclose(h_n, ref_h, atol=1e-5)
    assert jnp.allclose(c_n, ref_c, atol=1e-5)

    print("KERNEL_OK")
</pallas_src>

<mosaic_0001>
module attributes {stable_mosaic.version = 11 : i64} {
  func.func @_skip_lstm_kernel(%arg0: i32, %arg1: memref<32x16xf32, #tpu.memory_space<vmem>>, %arg2: memref<16x512xf32, #tpu.memory_space<vmem>>, %arg3: memref<128x512xf32, #tpu.memory_space<vmem>>, %arg4: memref<1x512xf32, #tpu.memory_space<vmem>>, %arg5: memref<8x128xf32, #tpu.memory_space<vmem>>, %arg6: memref<8x128xf32, #tpu.memory_space<vmem>>, %arg7: memref<32x512xf32, #tpu.memory_space<vmem>>, %arg8: memref<8x128xf32, #tpu.memory_space<vmem>>, %arg9: memref<8x128xf32, #tpu.memory_space<vmem>>) attributes {dimension_semantics = [#tpu.dimension_semantics<arbitrary>], iteration_bounds = array<i64: 2>, scalar_prefetch = 0 : i64, scratch_operands = 3 : i64, tpu.core_type = #tpu.core_type<tc>, window_params = [{transform_indices = @transform_0, window_bounds = array<i64: 32, 16>}, {pipeline_mode = #tpu.pipeline_mode<synchronous>, transform_indices = @transform_1, window_bounds = array<i64: 16, 512>}, {pipeline_mode = #tpu.pipeline_mode<synchronous>, transform_indices = @transform_2, window_bounds = array<i64: 128, 512>}, {pipeline_mode = #tpu.pipeline_mode<synchronous>, transform_indices = @transform_3, window_bounds = array<i64: 1, 512>}, {pipeline_mode = #tpu.pipeline_mode<synchronous>, transform_indices = @transform_4, window_bounds = array<i64: 8, 128>}, {pipeline_mode = #tpu.pipeline_mode<synchronous>, transform_indices = @transform_5, window_bounds = array<i64: 8, 128>}]} {
    %c0_i32 = arith.constant 0 : i32
    %0 = arith.cmpi eq, %arg0, %c0_i32 : i32
    %1 = arith.extui %0 : i1 to i32
    %c0_i32_0 = arith.constant 0 : i32
    %2 = arith.cmpi ne, %1, %c0_i32_0 : i32
    scf.if %2 {
      %cst_44 = arith.constant 0.000000e+00 : f32
      %108 = vector.broadcast %cst_44 : f32 to vector<8x128xf32>
      %c0_45 = arith.constant 0 : index
      %c0_46 = arith.constant 0 : index
      %109 = vector.load %arg8[%c0_45, %c0_46] : memref<8x128xf32, #tpu.memory_space<vmem>>, vector<8x128xf32>
      tpu.vector_store %arg8[%c0_45, %c0_46], %108 {strides = array<i32>} : memref<8x128xf32, #tpu.memory_space<vmem>>, vector<8x128xf32>,
      %cst_47 = arith.constant 0.000000e+00 : f32
      %110 = vector.broadcast %cst_47 : f32 to vector<8x128xf32>
      %c0_48 = arith.constant 0 : index
      %c0_49 = arith.constant 0 : index
      %111 = vector.load %arg9[%c0_48, %c0_49] : memref<8x128xf32, #tpu.memory_space<vmem>>, vector<8x128xf32>
      tpu.vector_store %arg9[%c0_48, %c0_49], %110 {strides = array<i32>} : memref<8x128xf32, #tpu.memory_space<vmem>>, vector<8x128xf32>,
    } else {
    }
    %c0 = arith.constant 0 : index
    %c0_1 = arith.constant 0 : index
    %3 = vector.load %arg1[%c0, %c0_1] : memref<32x16xf32, #tpu.memory_space<vmem>>, vector<32x16xf32>
    %c0_2 = arith.constant 0 : index
    %c0_3 = arith.constant 0 : index
    %4 = vector.load %arg2[%c0_2, %c0_3] : memref<16x512xf32, #tpu.memory_space<vmem>>, vector<16x512xf32>
    %cst = arith.constant dense<0.000000e+00> : vector<32x512xf32>
    %5 = tpu.matmul %3, %4, %cst {dimension_numbers = #tpu.dot_dimension_numbers<[1], [0], [0], [1], [0, 0, 1, 1], [], []>} : vector<32x16xf32>, vector<16x512xf32>, vector<32x512xf32> -> vector<32x512xf32>
    %c0_4 = arith.constant 0 : index
    %c0_5 = arith.constant 0 : index
    %6 = vector.load %arg4[%c0_4, %c0_5] : memref<1x512xf32, #tpu.memory_space<vmem>>, vector<1x512xf32>
    %7 = vector.broadcast %6 : vector<1x512xf32> to vector<32x512xf32>
    %8 = arith.addf %5, %7 : vector<32x512xf32>
    %c0_6 = arith.constant 0 : index
    %c0_7 = arith.constant 0 : index
    %9 = vector.load %arg7[%c0_6, %c0_7] : memref<32x512xf32, #tpu.memory_space<vmem>>, vector<32x512xf32>
    tpu.vector_store %arg7[%c0_6, %c0_7], %8 {strides = array<i32>} : memref<32x512xf32, #tpu.memory_space<vmem>>, vector<32x512xf32>,
    %c0_8 = arith.constant 0 : index
    %c0_9 = arith.constant 0 : index
    %10 = vector.load %arg8[%c0_8, %c0_9] : memref<8x128xf32, #tpu.memory_space<vmem>>, vector<8x128xf32>
    %c0_10 = arith.constant 0 : index
    %c0_11 = arith.constant 0 : index
    %11 = vector.load %arg9[%c0_10, %c0_11] : memref<8x128xf32, #tpu.memory_space<vmem>>, vector<8x128xf32>
    %c0_i32_12 = arith.constant 0 : i32
    %c8_i32 = arith.constant 8 : i32
    %12 = arith.muli %c0_i32_12, %c8_i32 : i32
    %13 = tpu.assume_multiple %12, 8 : i32
    %14 = arith.index_cast %13 : i32 to index
    %c0_13 = arith.constant 0 : index
    %15 = vector.load %arg7[%14, %c0_13] : memref<32x512xf32, #tpu.memory_space<vmem>>, vector<8x512xf32>
    %c0_14 = arith.constant 0 : index
    %c0_15 = arith.constant 0 : index
    %16 = vector.load %arg3[%c0_14, %c0_15] : memref<128x512xf32, #tpu.memory_space<vmem>>, vector<128x512xf32>
    %cst_16 = arith.constant dense<0.000000e+00> : vector<8x512xf32>
    %17 = tpu.matmul %10, %16, %cst_16 {dimension_numbers = #tpu.dot_dimension_numbers<[1], [0], [0], [1], [0, 0, 1, 1], [], []>} : vector<8x128xf32>, vector<128x512xf32>, vector<8x512xf32> -> vector<8x512xf32>
    %18 = arith.addf %15, %17 : vector<8x512xf32>
    %19 = vector.extract_strided_slice %18 {offsets = [0, 0], sizes = [8, 384], strides = [1, 1]} : vector<8x512xf32> to vector<8x384xf32>
    %20 = arith.negf %19 : vector<8x384xf32>
    %21 = math.exp %20 : vector<8x384xf32>
    %cst_17 = arith.constant 1.000000e+00 : f32
    %22 = vector.broadcast %cst_17 : f32 to vector<8x384xf32>
    %23 = arith.addf %22, %21 : vector<8x384xf32>
    %24 = arith.divf %22, %23 : vector<8x384xf32>
    %25 = vector.extract_strided_slice %24 {offsets = [0, 0], sizes = [8, 128], strides = [1, 1]} : vector<8x384xf32> to vector<8x128xf32>
    %26 = vector.extract_strided_slice %24 {offsets = [0, 128], sizes = [8, 128], strides = [1, 1]} : vector<8x384xf32> to vector<8x128xf32>
    %27 = vector.extract_strided_slice %24 {offsets = [0, 256], sizes = [8, 128], strides = [1, 1]} : vector<8x384xf32> to vector<8x128xf32>
    %28 = vector.extract_strided_slice %18 {offsets = [0, 384], sizes = [8, 128], strides = [1, 1]} : vector<8x512xf32> to vector<8x128xf32>
    %29 = math.tanh %28 : vector<8x128xf32>
    %30 = arith.mulf %26, %11 : vector<8x128xf32>
    %31 = arith.mulf %25, %29 : vector<8x128xf32>
    %32 = arith.addf %30, %31 : vector<8x128xf32>
    %33 = math.tanh %32 : vector<8x128xf32>
    %34 = arith.mulf %27, %33 : vector<8x128xf32>
    %c1_i32 = arith.constant 1 : i32
    %c8_i32_18 = arith.constant 8 : i32
    %35 = arith.muli %c1_i32, %c8_i32_18 : i32
    %36 = tpu.assume_multiple %35, 8 : i32
    %37 = arith.index_cast %36 : i32 to index
    %c0_19 = arith.constant 0 : index
    %38 = vector.load %arg7[%37, %c0_19] : memref<32x512xf32, #tpu.memory_space<vmem>>, vector<8x512xf32>
    %c0_20 = arith.constant 0 : index
    %c0_21 = arith.constant 0 : index
    %39 = vector.load %arg3[%c0_20, %c0_21] : memref<128x512xf32, #tpu.memory_space<vmem>>, vector<128x512xf32>
    %cst_22 = arith.constant dense<0.000000e+00> : vector<8x512xf32>
    %40 = tpu.matmul %34, %39, %cst_22 {dimension_numbers = #tpu.dot_dimension_numbers<[1], [0], [0], [1], [0, 0, 1, 1], [], []>} : vector<8x128xf32>, vector<128x512xf32>, vector<8x512xf32> -> vector<8x512xf32>
    %41 = arith.addf %38, %40 : vector<8x512xf32>
    %42 = vector.extract_strided_slice %41 {offsets = [0, 0], sizes = [8, 384], strides = [1, 1]} : vector<8x512xf32> to vector<8x384xf32>
    %43 = arith.negf %42 : vector<8x384xf32>
    %44 = math.exp %43 : vector<8x384xf32>
    %cst_23 = arith.constant 1.000000e+00 : f32
    %45 = vector.broadcast %cst_23 : f32 to vector<8x384xf32>
    %46 = arith.addf %45, %44 : vector<8x384xf32>
    %47 = arith.divf %45, %46 : vector<8x384xf32>
    %48 = vector.extract_strided_slice %47 {offsets = [0, 0], sizes = [8, 128], strides = [1, 1]} : vector<8x384xf32> to vector<8x128xf32>
    %49 = vector.extract_strided_slice %47 {offsets = [0, 128], sizes = [8, 128], strides = [1, 1]} : vector<8x384xf32> to vector<8x128xf32>
    %50 = vector.extract_strided_slice %47 {offsets = [0, 256], sizes = [8, 128], strides = [1, 1]} : vector<8x384xf32> to vector<8x128xf32>
    %51 = vector.extract_strided_slice %41 {offsets = [0, 384], sizes = [8, 128], strides = [1, 1]} : vector<8x512xf32> to vector<8x128xf32>
    %52 = math.tanh %51 : vector<8x128xf32>
    %53 = arith.mulf %49, %32 : vector<8x128xf32>
    %54 = arith.mulf %48, %52 : vector<8x128xf32>
    %55 = arith.addf %53, %54 : vector<8x128xf32>
    %56 = math.tanh %55 : vector<8x128xf32>
    %57 = arith.mulf %50, %56 : vector<8x128xf32>
    %c2_i32 = arith.constant 2 : i32
    %c8_i32_24 = arith.constant 8 : i32
    %58 = arith.muli %c2_i32, %c8_i32_24 : i32
    %59 = tpu.assume_multiple %58, 8 : i32
    %60 = arith.index_cast %59 : i32 to index
    %c0_25 = arith.constant 0 : index
    %61 = vector.load %arg7[%60, %c0_25] : memref<32x512xf32, #tpu.memory_space<vmem>>, vector<8x512xf32>
    %c0_26 = arith.constant 0 : index
    %c0_27 = arith.constant 0 : index
    %62 = vector.load %arg3[%c0_26, %c0_27] : memref<128x512xf32, #tpu.memory_space<vmem>>, vector<128x512xf32>
    %cst_28 = arith.constant dense<0.000000e+00> : vector<8x512xf32>
    %63 = tpu.matmul %57, %62, %cst_28 {dimension_numbers = #tpu.dot_dimension_numbers<[1], [0], [0], [1], [0, 0, 1, 1], [], []>} : vector<8x128xf32>, vector<128x512xf32>, vector<8x512xf32> -> vector<8x512xf32>
    %64 = arith.addf %61, %63 : vector<8x512xf32>
    %65 = vector.extract_strided_slice %64 {offsets = [0, 0], sizes = [8, 384], strides = [1, 1]} : vector<8x512xf32> to vector<8x384xf32>
    %66 = arith.negf %65 : vector<8x384xf32>
    %67 = math.exp %66 : vector<8x384xf32>
    %cst_29 = arith.constant 1.000000e+00 : f32
    %68 = vector.broadcast %cst_29 : f32 to vector<8x384xf32>
    %69 = arith.addf %68, %67 : vector<8x384xf32>
    %70 = arith.divf %68, %69 : vector<8x384xf32>
    %71 = vector.extract_strided_slice %70 {offsets = [0, 0], sizes = [8, 128], strides = [1, 1]} : vector<8x384xf32> to vector<8x128xf32>
    %72 = vector.extract_strided_slice %70 {offsets = [0, 128], sizes = [8, 128], strides = [1, 1]} : vector<8x384xf32> to vector<8x128xf32>
    %73 = vector.extract_strided_slice %70 {offsets = [0, 256], sizes = [8, 128], strides = [1, 1]} : vector<8x384xf32> to vector<8x128xf32>
    %74 = vector.extract_strided_slice %64 {offsets = [0, 384], sizes = [8, 128], strides = [1, 1]} : vector<8x512xf32> to vector<8x128xf32>
    %75 = math.tanh %74 : vector<8x128xf32>
    %76 = arith.mulf %72, %55 : vector<8x128xf32>
    %77 = arith.mulf %71, %75 : vector<8x128xf32>
    %78 = arith.addf %76, %77 : vector<8x128xf32>
    %79 = math.tanh %78 : vector<8x128xf32>
    %80 = arith.mulf %73, %79 : vector<8x128xf32>
    %c3_i32 = arith.constant 3 : i32
    %c8_i32_30 = arith.constant 8 : i32
    %81 = arith.muli %c3_i32, %c8_i32_30 : i32
    %82 = tpu.assume_multiple %81, 8 : i32
    %83 = arith.index_cast %82 : i32 to index
    %c0_31 = arith.constant 0 : index
    %84 = vector.load %arg7[%83, %c0_31] : memref<32x512xf32, #tpu.memory_space<vmem>>, vector<8x512xf32>
    %c0_32 = arith.constant 0 : index
    %c0_33 = arith.constant 0 : index
    %85 = vector.load %arg3[%c0_32, %c0_33] : memref<128x512xf32, #tpu.memory_space<vmem>>, vector<128x512xf32>
    %cst_34 = arith.constant dense<0.000000e+00> : vector<8x512xf32>
    %86 = tpu.matmul %80, %85, %cst_34 {dimension_numbers = #tpu.dot_dimension_numbers<[1], [0], [0], [1], [0, 0, 1, 1], [], []>} : vector<8x128xf32>, vector<128x512xf32>, vector<8x512xf32> -> vector<8x512xf32>
    %87 = arith.addf %84, %86 : vector<8x512xf32>
    %88 = vector.extract_strided_slice %87 {offsets = [0, 0], sizes = [8, 384], strides = [1, 1]} : vector<8x512xf32> to vector<8x384xf32>
    %89 = arith.negf %88 : vector<8x384xf32>
    %90 = math.exp %89 : vector<8x384xf32>
    %cst_35 = arith.constant 1.000000e+00 : f32
    %91 = vector.broadcast %cst_35 : f32 to vector<8x384xf32>
    %92 = arith.addf %91, %90 : vector<8x384xf32>
    %93 = arith.divf %91, %92 : vector<8x384xf32>
    %94 = vector.extract_strided_slice %93 {offsets = [0, 0], sizes = [8, 128], strides = [1, 1]} : vector<8x384xf32> to vector<8x128xf32>
    %95 = vector.extract_strided_slice %93 {offsets = [0, 128], sizes = [8, 128], strides = [1, 1]} : vector<8x384xf32> to vector<8x128xf32>
    %96 = vector.extract_strided_slice %93 {offsets = [0, 256], sizes = [8, 128], strides = [1, 1]} : vector<8x384xf32> to vector<8x128xf32>
    %97 = vector.extract_strided_slice %87 {offsets = [0, 384], sizes = [8, 128], strides = [1, 1]} : vector<8x512xf32> to vector<8x128xf32>
    %98 = math.tanh %97 : vector<8x128xf32>
    %99 = arith.mulf %95, %78 : vector<8x128xf32>
    %100 = arith.mulf %94, %98 : vector<8x128xf32>
    %101 = arith.addf %99, %100 : vector<8x128xf32>
    %102 = math.tanh %101 : vector<8x128xf32>
    %103 = arith.mulf %96, %102 : vector<8x128xf32>
    %c4_i32 = arith.constant 4 : i32
    %c0_36 = arith.constant 0 : index
    %c0_37 = arith.constant 0 : index
    %104 = vector.load %arg8[%c0_36, %c0_37] : memref<8x128xf32, #tpu.memory_space<vmem>>, vector<8x128xf32>
    tpu.vector_store %arg8[%c0_36, %c0_37], %103 {strides = array<i32>} : memref<8x128xf32, #tpu.memory_space<vmem>>, vector<8x128xf32>,
    %c0_38 = arith.constant 0 : index
    %c0_39 = arith.constant 0 : index
    %105 = vector.load %arg9[%c0_38, %c0_39] : memref<8x128xf32, #tpu.memory_space<vmem>>, vector<8x128xf32>
    tpu.vector_store %arg9[%c0_38, %c0_39], %101 {strides = array<i32>} : memref<8x128xf32, #tpu.memory_space<vmem>>, vector<8x128xf32>,
    %c0_40 = arith.constant 0 : index
    %c0_41 = arith.constant 0 : index
    %106 = vector.load %arg5[%c0_40, %c0_41] : memref<8x128xf32, #tpu.memory_space<vmem>>, vector<8x128xf32>
    tpu.vector_store %arg5[%c0_40, %c0_41], %103 {strides = array<i32>} : memref<8x128xf32, #tpu.memory_space<vmem>>, vector<8x128xf32>,
    %c0_42 = arith.constant 0 : index
    %c0_43 = arith.constant 0 : index
    %107 = vector.load %arg6[%c0_42, %c0_43] : memref<8x128xf32, #tpu.memory_space<vmem>>, vector<8x128xf32>
    tpu.vector_store %arg6[%c0_42, %c0_43], %101 {strides = array<i32>} : memref<8x128xf32, #tpu.memory_space<vmem>>, vector<8x128xf32>,
    return
  }
  func.func @transform_0(%arg0: i32) -> (i32, i32) {
    %c0_i32 = arith.constant 0 : i32
    %c0_i32_0 = arith.constant 0 : i32
    return %arg0, %c0_i32 : i32, i32
  }
  func.func @transform_1(%arg0: i32) -> (i32, i32) {
    %c0_i32 = arith.constant 0 : i32
    %c0_i32_0 = arith.constant 0 : i32
    %c0_i32_1 = arith.constant 0 : i32
    return %c0_i32, %c0_i32_0 : i32, i32
  }
  func.func @transform_2(%arg0: i32) -> (i32, i32) {
    %c0_i32 = arith.constant 0 : i32
    %c0_i32_0 = arith.constant 0 : i32
    %c0_i32_1 = arith.constant 0 : i32
    return %c0_i32, %c0_i32_0 : i32, i32
  }
  func.func @transform_3(%arg0: i32) -> (i32, i32) {
    %c0_i32 = arith.constant 0 : i32
    %c0_i32_0 = arith.constant 0 : i32
    %c0_i32_1 = arith.constant 0 : i32
    return %c0_i32, %c0_i32_0 : i32, i32
  }
  func.func @transform_4(%arg0: i32) -> (i32, i32) {
    %c0_i32 = arith.constant 0 : i32
    %c0_i32_0 = arith.constant 0 : i32
    %c0_i32_1 = arith.constant 0 : i32
    return %c0_i32, %c0_i32_0 : i32, i32
  }
  func.func @transform_5(%arg0: i32) -> (i32, i32) {
    %c0_i32 = arith.constant 0 : i32
    %c0_i32_0 = arith.constant 0 : i32
    %c0_i32_1 = arith.constant 0 : i32
    return %c0_i32, %c0_i32_0 : i32, i32
  }
}

</mosaic_0001>

<llo_original>
// kernel: tpu_custom_call.1
$region0: #{tpu_custom_call.1}
  #allocation0 [shape = 'u32[]', space=smem, size = 0x4, offset = 0x4, fixed_abs, tag = 'smem constant byte address 0x4 - core index']
  #allocation1 [shape = 'u32[144,128]{1,0:T(1,128)}', space=vmem, size = 0x12000, scoped, tag = 'internal scratch']
  #allocation2 [shape = 'f32[32,512]{1,0:T(8,128)}', space=vmem, size = 0x10000, scoped, tag = 'scratch operand']
  #allocation3 [shape = 'f32[8,128]{1,0:T(8,128)}', space=vmem, size = 0x1000, scoped, tag = 'scratch operand']
  #allocation4 [shape = 'f32[8,128]{1,0:T(8,128)}', space=vmem, size = 0x1000, scoped, tag = 'scratch operand']
  %s0 = inlined_call_operand.vmem [shape: f32[64,16], index: 0, kind: input, shape index: {}]
  %s1 = inlined_call_operand.vmem [shape: f32[16,512], index: 1, kind: input, shape index: {}]
  %s2 = inlined_call_operand.hbm [shape: f32[128,512], index: 2, kind: input, shape index: {}]
  %s3 = inlined_call_operand.vmem [shape: f32[1,512], index: 3, kind: input, shape index: {}]
  %s4 = inlined_call_operand.hbm [shape: f32[8,128], index: 4, kind: output, shape index: {0}]
  %s5 = inlined_call_operand.hbm [shape: f32[8,128], index: 5, kind: output, shape index: {1}]
  %6 = xla_tuple %s4, %s5
  %s7 = sld [smem:[#allocation0]]
  $region65: #{tpu_custom_call.1} parent=0
    _
  %s9 = ssub.s32 1, %s7
  %s10 = scalar_select 0, %s9, %s7
  $region1: #{tpu_custom_call.1} parent=0
    #allocation5 [shape = 'u8[262144]{0}', space=vmem, size = 0x40000, scoped, tag = 'input window, operand 2, single buffered']
    #allocation6 [shape = 's32[2]{0}', space=sflag, size = 0x8, scoped, tag = 'scoped memory for tpu_custom_call.1']
    #allocation7 [shape = 's32[2]{0}', space=sflag, size = 0x8, scoped, tag = 'scoped memory for tpu_custom_call.1']
    #allocation8 [shape = 'u8[4096]{0}', space=vmem, size = 0x1000, scoped, tag = 'output window, operand 0, single buffered']
    #allocation9 [shape = 'u8[4096]{0}', space=vmem, size = 0x1000, scoped, tag = 'output window, operand 1, single buffered']
    #allocation10 [shape = 's32[1]{0}', space=sflag, size = 0x4, scoped, tag = 'scoped memory for tpu_custom_call.1']
    %11 = vsyncpa [#allocation6], 0
    %12 = vsyncpa [#allocation7], 0
    %13 = vsyncpa [#allocation10], 0
    loop: start=0, step=1, limit=4
    $region2: #{tpu_custom_call.1} parent=1 // loop_pre_header
      _
    $region3: #{tpu_custom_call.1} parent=1 // loop_header
      %s15 = sphi 0, %s19
      %p16 = scmp.ge.s32.totalorder %s15, 4
      %s25 = sphi 0, %s27
      %s28 = sphi 0, %s25
      %s29 = sphi 0, %s28
      %s45 = sphi 0, %s29
      %s49 = sphi 0, %s49
      %s51 = sphi 0, %s49
      %s52 = sphi 0, %s51
      %s66 = sphi 0, %s52
      %s70 = sphi 0, %s70
      %s72 = sphi 0, %s70
      %s73 = sphi 0, %s72
      %s87 = sphi 0, %s73
      %s91 = sphi 0, %s91
      %s93 = sphi 0, %s91
      %s94 = sphi 0, %s93
      %s108 = sphi 0, %s94
      %s112 = sphi 0, %s112
      %s114 = sphi 0, %s112
      %s115 = sphi 0, %s114
      %s129 = sphi 0, %s115
      %s133 = sphi 0, %s133
      %s135 = sphi 0, %s133
      %s136 = sphi 0, %s135
      %s150 = sphi 0, %s136
    $region4: #{tpu_custom_call.1} parent=1 // loop_header_branch
      %18 = sbr.rel (%p16) target = $region8
    $region5: #{tpu_custom_call.1} parent=1 // loop_body
      %s20 = ssub.s32 %s15, 1
      %s21 = ssub.s32 %s15, 2
      %s22 = sadd.s32 %s15, 1
      %s23 = ssub.s32 %s15, %s22
      %p24 = scmp.eq.s32.totalorder %s23, 0
      %s26 = sadd.s32 %s25, 1
      %s27 = scalar_select %p24, %s25, %s26
      %p30 = pneg %p24
      %p31 = scmp.eq.s32.totalorder %s15, 1
      %p32 = por %p30, %p31
      %p33 = scmp.ne.s32.totalorder %s25, %s28
      %p34 = scmp.eq.s32.totalorder %s15, 0
      %p35 = por %p33, %p34
      %p36 = scmp.ne.s32.totalorder %s25, %s28
      %p37 = scmp.eq.s32.totalorder %s20, 1
      %p38 = por %p36, %p37
      %p39 = scmp.ne.s32.totalorder %s28, %s29
      %p40 = scmp.eq.s32.totalorder %s20, 0
      %p41 = por %p39, %p40
      %p42 = scmp.ne.s32.totalorder %s28, %s29
      %p43 = scmp.eq.s32.totalorder %s21, 1
      %p44 = por %p42, %p43
      %p46 = scmp.ne.s32.totalorder %s29, %s45
      %p47 = scmp.eq.s32.totalorder %s21, 0
      %p48 = por %p46, %p47
      %s50 = sadd.s32 %s49, 1
      %p53 = scmp.eq.s32.totalorder %s15, 1
      %p54 = scmp.ne.s32.totalorder %s49, %s51
      %p55 = scmp.eq.s32.totalorder %s15, 0
      %p56 = por %p54, %p55
      %p57 = scmp.ne.s32.totalorder %s49, %s51
      %p58 = scmp.eq.s32.totalorder %s20, 1
      %p59 = por %p57, %p58
      %p60 = scmp.ne.s32.totalorder %s51, %s52
      %p61 = scmp.eq.s32.totalorder %s20, 0
      %p62 = por %p60, %p61
      %p63 = scmp.ne.s32.totalorder %s51, %s52
      %p64 = scmp.eq.s32.totalorder %s21, 1
      %p65 = por %p63, %p64
      %p67 = scmp.ne.s32.totalorder %s52, %s66
      %p68 = scmp.eq.s32.totalorder %s21, 0
      %p69 = por %p67, %p68
      %s71 = sadd.s32 %s70, 1
      %p74 = scmp.eq.s32.totalorder %s15, 1
      %p75 = scmp.ne.s32.totalorder %s70, %s72
      %p76 = scmp.eq.s32.totalorder %s15, 0
      %p77 = por %p75, %p76
      %p78 = scmp.ne.s32.totalorder %s70, %s72
      %p79 = scmp.eq.s32.totalorder %s20, 1
      %p80 = por %p78, %p79
      %p81 = scmp.ne.s32.totalorder %s72, %s73
      %p82 = scmp.eq.s32.totalorder %s20, 0
      %p83 = por %p81, %p82
      %p84 = scmp.ne.s32.totalorder %s72, %s73
      %p85 = scmp.eq.s32.totalorder %s21, 1
      %p86 = por %p84, %p85
      %p88 = scmp.ne.s32.totalorder %s73, %s87
      %p89 = scmp.eq.s32.totalorder %s21, 0
      %p90 = por %p88, %p89
      %s92 = sadd.s32 %s91, 1
      %p95 = scmp.eq.s32.totalorder %s15, 1
      %p96 = scmp.ne.s32.totalorder %s91, %s93
      %p97 = scmp.eq.s32.totalorder %s15, 0
      %p98 = por %p96, %p97
      %p99 = scmp.ne.s32.totalorder %s91, %s93
      %p100 = scmp.eq.s32.totalorder %s20, 1
      %p101 = por %p99, %p100
      %p102 = scmp.ne.s32.totalorder %s93, %s94
      %p103 = scmp.eq.s32.totalorder %s20, 0
      %p104 = por %p102, %p103
      %p105 = scmp.ne.s32.totalorder %s93, %s94
      %p106 = scmp.eq.s32.totalorder %s21, 1
      %p107 = por %p105, %p106
      %p109 = scmp.ne.s32.totalorder %s94, %s108
      %p110 = scmp.eq.s32.totalorder %s21, 0
      %p111 = por %p109, %p110
      %s113 = sadd.s32 %s112, 1
      %p116 = scmp.eq.s32.totalorder %s15, 1
      %p117 = scmp.ne.s32.totalorder %s112, %s114
      %p118 = scmp.eq.s32.totalorder %s15, 0
      %p119 = por %p117, %p118
      %p120 = scmp.ne.s32.totalorder %s112, %s114
      %p121 = scmp.eq.s32.totalorder %s20, 1
      %p122 = por %p120, %p121
      %p123 = scmp.ne.s32.totalorder %s114, %s115
      %p124 = scmp.eq.s32.totalorder %s20, 0
      %p125 = por %p123, %p124
      %p126 = scmp.ne.s32.totalorder %s114, %s115
      %p127 = scmp.eq.s32.totalorder %s21, 1
      %p128 = por %p126, %p127
      %p130 = scmp.ne.s32.totalorder %s115, %s129
      %p131 = scmp.eq.s32.totalorder %s21, 0
      %p132 = por %p130, %p131
      %s134 = sadd.s32 %s133, 1
      %p137 = scmp.eq.s32.totalorder %s15, 1
      %p138 = scmp.ne.s32.totalorder %s133, %s135
      %p139 = scmp.eq.s32.totalorder %s15, 0
      %p140 = por %p138, %p139
      %p141 = scmp.ne.s32.totalorder %s133, %s135
      %p142 = scmp.eq.s32.totalorder %s20, 1
      %p143 = por %p141, %p142
      %p144 = scmp.ne.s32.totalorder %s135, %s136
      %p145 = scmp.eq.s32.totalorder %s20, 0
      %p146 = por %p144, %p145
      %p147 = scmp.ne.s32.totalorder %s135, %s136
      %p148 = scmp.eq.s32.totalorder %s21, 1
      %p149 = por %p147, %p148
      %p151 = scmp.ne.s32.totalorder %s136, %s150
      %p152 = scmp.eq.s32.totalorder %s21, 0
      %p153 = por %p151, %p152
      %p154 = scmp.le.s32.totalorder 1, %s15
      %p155 = scmp.lt.s32.totalorder %s15, 3
      %p156 = pnand %p154, %p155
      %p157 = pneg %p156
      // Predicated region
      $region9: #{tpu_custom_call.1} parent=5 // pred_check
        _
      $region10: #{tpu_custom_call.1} parent=5 // pred_check_branch
        %159 = sbr.rel (%p156) target = $region12
      $region11: #{tpu_custom_call.1} parent=5 // pred_region
        %s160 = ssub.s32 %s15, 1
        // Predicated region
        $region13: #{tpu_custom_call.1} parent=11 // pred_check
          %p161 = pneg %p62
        $region14: #{tpu_custom_call.1} parent=11 // pred_check_branch
          %163 = sbr.rel (%p161) target = $region16
        $region15: #{tpu_custom_call.1} parent=11 // pred_region
          _
        $region16: #{tpu_custom_call.1} parent=11 // pred_fallthru
          _
        // Predicated region
        $region17: #{tpu_custom_call.1} parent=11 // pred_check
          %p164 = pneg %p83
        $region18: #{tpu_custom_call.1} parent=11 // pred_check_branch
          %166 = sbr.rel (%p164) target = $region20
        $region19: #{tpu_custom_call.1} parent=11 // pred_region
          %s168 = ssub.s32 8192, 8192
          %169 = vsyncadd [#allocation6], %s168
          %s170 = sshll.u32 [#allocation5], 4
          %s171 = int_to_ptr.vmem [resolvable:$true] %s170
          %176 = dma.hbm_to_vmem [thread:$0]  %s2, 8192, %s171, [#allocation6], 512, 512, 32
        $region20: #{tpu_custom_call.1} parent=11 // pred_fallthru
          _
        // Predicated region
        $region21: #{tpu_custom_call.1} parent=11 // pred_check
          %p177 = pneg %p104
        $region22: #{tpu_custom_call.1} parent=11 // pred_check_branch
          %179 = sbr.rel (%p177) target = $region24
        $region23: #{tpu_custom_call.1} parent=11 // pred_region
          _
        $region24: #{tpu_custom_call.1} parent=11 // pred_fallthru
          _
      $region12: #{tpu_custom_call.1} parent=5 // pred_fallthru
        _
      %p180 = scmp.lt.s32.totalorder %s15, 2
      // Predicated region
      $region25: #{tpu_custom_call.1} parent=5 // pred_check
        %p181 = pneg %p180
      $region26: #{tpu_custom_call.1} parent=5 // pred_check_branch
        %183 = sbr.rel (%p181) target = $region28
      $region27: #{tpu_custom_call.1} parent=5 // pred_region
        // Predicated region
        $region29: #{tpu_custom_call.1} parent=27 // pred_check
          %p184 = pneg %p35
        $region30: #{tpu_custom_call.1} parent=27 // pred_check_branch
          %186 = sbr.rel (%p184) target = $region32
        $region31: #{tpu_custom_call.1} parent=27 // pred_region
          %s187 = smul.u32 4, %s15
          %p188 = scmp.lt.s32.totalorder %s187, 7
          %s189 = scalar_select %p188, %s187, 7
          %s190 = smul.addr %s189, 8
          %s191 = scalar_lea.vmem %s0, %s190
          %s192 = smul.u32 4, %s15
        $region32: #{tpu_custom_call.1} parent=27 // pred_fallthru
          _
      $region28: #{tpu_custom_call.1} parent=5 // pred_fallthru
        _
      %p193 = scmp.le.s32.totalorder 1, %s15
      %p194 = scmp.lt.s32.totalorder %s15, 3
      %p195 = pnand %p193, %p194
      %p196 = pneg %p195
      // Predicated region
      $region33: #{tpu_custom_call.1} parent=5 // pred_check
        _
      $region34: #{tpu_custom_call.1} parent=5 // pred_check_branch
        %198 = sbr.rel (%p195) target = $region36
      $region35: #{tpu_custom_call.1} parent=5 // pred_region
        %s199 = ssub.s32 %s15, 1
        // Predicated region
        $region37: #{tpu_custom_call.1} parent=35 // pred_check
          %p200 = pneg %p83
        $region38: #{tpu_custom_call.1} parent=35 // pred_check_branch
          %202 = sbr.rel (%p200) target = $region40
        $region39: #{tpu_custom_call.1} parent=35 // pred_region
          %203 = dma.done [#allocation6], 8192
        $region40: #{tpu_custom_call.1} parent=35 // pred_fallthru
          _
        %s204 = smul.u32 4, %s20
        %p205 = scmp.lt.s32.totalorder %s204, 7
        %s206 = scalar_select %p205, %s204, 7
        %s207 = smul.addr %s206, 8
        %s208 = scalar_lea.vmem %s0, %s207
        %p209 = pneg %p41
        %p210 = pneg %p38
        %p211 = pneg %p62
        %p212 = pneg %p59
        %p213 = pneg %p83
        %p214 = pneg %p80
        %p215 = pneg %p104
        %p216 = pneg %p101
        %p217 = pneg %p125
        %p218 = pneg %p122
        %p219 = pneg %p146
        %p220 = pneg %p143
        %s221 = smul.u32 4, %s20
        %p222 = scmp.lt.s32.totalorder %s221, 7
        %s223 = scalar_select %p222, %s221, 7
        %s224 = smul.addr %s223, 8
        %s225 = scalar_lea.vmem %s0, %s224
        %s226 = smul.u32 4, %s20
        %p227 = scmp.eq.s32.totalorder %s20, 0
        // Predicated region
        $region41: #{tpu_custom_call.1} parent=35 // pred_check
          %p228 = pneg %p227
        $region42: #{tpu_custom_call.1} parent=35 // pred_check_branch
          %230 = sbr.rel (%p228) target = $region44
        $region43: #{tpu_custom_call.1} parent=35 // pred_region
          %231 = vst [vmem:[#allocation3] sm:$0xff] 0.0
          %232 = vst [vmem:[#allocation4] sm:$0xff] 0.0
        $region44: #{tpu_custom_call.1} parent=35 // pred_fallthru
          _
        %v233 = vld [vmem:[%s225] sm:$0xff]
        %v234 = vld [vmem:[%s225 + $0x8] sm:$0xff]
        %v235 = vld [vmem:[%s225 + $0x10] sm:$0xff]
        %v236 = vld [vmem:[%s225 + $0x18] sm:$0xff]
        %v237 = vld [vmem:[%s1] sm:$0xff]
        %v238 = vld [vmem:[%s1 + $0x8] sm:$0xff]
        %v239 = vld [vmem:[%s1 + $0x10] sm:$0xff]
        %v240 = vld [vmem:[%s1 + $0x18] sm:$0xff]
        %v241 = vld [vmem:[%s1 + $0x20] sm:$0xff]
        %v242 = vld [vmem:[%s1 + $0x28] sm:$0xff]
        %v243 = vld [vmem:[%s1 + $0x30] sm:$0xff]
        %v244 = vld [vmem:[%s1 + $0x38] sm:$0xff]
        %v245 = vld [vmem:[%s3] sm:$0xf]
        %v247 = vlaneseq
        %v248 = vshrl.u32 %v247, 7
        %v249 = vsub.s32 0, %v248
        %v250 = vrot.slane %v245, %v249
        %v251 = vlaneseq
        %v252 = vshrl.u32 %v251, 7
        %v253 = vsub.s32 1, %v252
        %v254 = vrot.slane %v245, %v253
        %v255 = vlaneseq
        %v256 = vshrl.u32 %v255, 7
        %v257 = vsub.s32 2, %v256
        %v258 = vrot.slane %v245, %v257
        %v259 = vlaneseq
        %v260 = vshrl.u32 %v259, 7
        %v261 = vsub.s32 3, %v260
        %v262 = vrot.slane %v245, %v261
        %vm267 = vcmask 130048
        %v269 = vsel %vm267, %v233, 0
        %v272 = vsel %vm267, %v234, 0
        %v275 = vsel %vm267, %v235, 0
        %v278 = vsel %vm267, %v236, 0
        %280 = vmatprep.subr.mxu0 %v238
        %281 = vmatpush1.msra.mxu0 %v237
        %282 = vmatprep.subr.mxu0 %v242
        %283 = vmatpush1.msra.mxu0 %v241
        %284 = vmatprep.subr.mxu0 0.0
        %285 = vmatpush1.msra.mxu0 0.0
        %286 = vmatprep.subr.mxu0 0.0
        %287 = vmatpush1.msra.mxu0 0.0
        %288 = vmatprep.subr.mxu0 0.0
        %289 = vmatpush1.msra.mxu0 0.0
        %290 = vmatprep.subr.mxu0 0.0
        %291 = vmatpush1.msra.mxu0 0.0
        %292 = vmatprep.subr.mxu0 0.0
        %293 = vmatpush1.msra.mxu0 0.0
        %294 = vmatprep.subr.mxu0 0.0
        %295 = vmatpush1.msra.mxu0 0.0
        %296 = vmatprep.subr.mxu0 0.0
        %297 = vmatpush1.msra.mxu0 0.0
        %298 = vmatprep.subr.mxu0 0.0
        %299 = vmatpush1.msra.mxu0 0.0
        %300 = vmatprep.subr.mxu0 0.0
        %301 = vmatpush1.msra.mxu0 0.0
        %302 = vmatprep.subr.mxu0 0.0
        %303 = vmatpush1.msra.mxu0 0.0
        %304 = vmatprep.subr.mxu0 0.0
        %305 = vmatpush1.msra.mxu0 0.0
        %306 = vmatprep.subr.mxu0 0.0
        %307 = vmatpush1.msra.mxu0 0.0
        %308 = vmatprep.subr.mxu0 0.0
        %309 = vmatpush1.msra.mxu0 0.0
        %310 = vmatprep.subr.mxu0 0.0
        %311 = vmatpush1.msra.mxu0 0.0
        %312 = vmatprep.subr.mxu0 0.0
        %313 = vmatpush1.msra.mxu0 0.0
        %314 = vmatprep.subr.mxu0 0.0
        %315 = vmatpush1.msra.mxu0 0.0
        %316 = vmatprep.subr.mxu0 0.0
        %317 = vmatpush1.msra.mxu0 0.0
        %318 = vmatprep.subr.mxu0 0.0
        %319 = vmatpush1.msra.mxu0 0.0
        %320 = vmatprep.subr.mxu0 0.0
        %321 = vmatpush1.msra.mxu0 0.0
        %322 = vmatprep.subr.mxu0 0.0
        %323 = vmatpush1.msra.mxu0 0.0
        %324 = vmatprep.subr.mxu0 0.0
        %325 = vmatpush1.msra.mxu0 0.0
        %326 = vmatprep.subr.mxu0 0.0
        %327 = vmatpush1.msra.mxu0 0.0
        %328 = vmatprep.subr.mxu0 0.0
        %329 = vmatpush1.msra.mxu0 0.0
        %330 = vmatprep.subr.mxu0 0.0
        %331 = vmatpush1.msra.mxu0 0.0
        %332 = vmatprep.subr.mxu0 0.0
        %333 = vmatpush1.msra.mxu0 0.0
        %334 = vmatprep.subr.mxu0 0.0
        %335 = vmatpush1.msra.mxu0 0.0
        %336 = vmatprep.subr.mxu0 0.0
        %337 = vmatpush1.msra.mxu0 0.0
        %338 = vmatprep.subr.mxu0 0.0
        %339 = vmatpush1.msra.mxu0 0.0
        %340 = vmatprep.subr.mxu0 0.0
        %341 = vmatpush1.msra.mxu0 0.0
        %342 = vmatprep.subr.mxu0 0.0
        %343 = vmatpush1.msra.mxu0 0.0
        %344 = vmatprep.mubr.f32.mxu0 0.0
        %345 = vmatmul.mubr.f32.gmra.mrb[0].mxu0 %v269
        %v346 = vpop.f32.mrb[0].mxu0
        %v347 = vadd.f32 %v250, %v346
        %v348 = vpop.f32.mrb[0].mxu0
        %v349 = vadd.f32 %v254, %v348
        %350 = vmatprep.mubr.f32.mxu0 0.0
        %351 = vmatmul.mubr.f32.gmra.mrb[0].mxu0 %v272
        %v352 = vpop.f32.mrb[0].mxu0
        %v353 = vadd.f32 %v250, %v352
        %v354 = vpop.f32.mrb[0].mxu0
        %v355 = vadd.f32 %v254, %v354
        %356 = vmatprep.mubr.f32.mxu0 0.0
        %357 = vmatmul.mubr.f32.gmra.mrb[0].mxu0 %v275
        %v358 = vpop.f32.mrb[0].mxu0
        %v359 = vadd.f32 %v250, %v358
        %v360 = vpop.f32.mrb[0].mxu0
        %v361 = vadd.f32 %v254, %v360
        %362 = vmatprep.mubr.f32.mxu0 0.0
        %363 = vmatmul.mubr.f32.gmra.mrb[0].mxu0 %v278
        %v364 = vpop.f32.mrb[0].mxu0
        %v365 = vadd.f32 %v250, %v364
        %v366 = vpop.f32.mrb[0].mxu0
        %v367 = vadd.f32 %v254, %v366
        %368 = vdwg.mxu0
        %369 = vmatprep.subr.mxu0 %v240
        %370 = vmatpush1.msra.mxu0 %v239
        %371 = vmatprep.subr.mxu0 %v244
        %372 = vmatpush1.msra.mxu0 %v243
        %373 = vmatprep.subr.mxu0 0.0
        %374 = vmatpush1.msra.mxu0 0.0
        %375 = vmatprep.subr.mxu0 0.0
        %376 = vmatpush1.msra.mxu0 0.0
        %377 = vmatprep.subr.mxu0 0.0
        %378 = vmatpush1.msra.mxu0 0.0
        %379 = vmatprep.subr.mxu0 0.0
        %380 = vmatpush1.msra.mxu0 0.0
        %381 = vmatprep.subr.mxu0 0.0
        %382 = vmatpush1.msra.mxu0 0.0
        %383 = vmatprep.subr.mxu0 0.0
        %384 = vmatpush1.msra.mxu0 0.0
        %385 = vmatprep.subr.mxu0 0.0
        %386 = vmatpush1.msra.mxu0 0.0
        %387 = vmatprep.subr.mxu0 0.0
        %388 = vmatpush1.msra.mxu0 0.0
        %389 = vmatprep.subr.mxu0 0.0
        %390 = vmatpush1.msra.mxu0 0.0
        %391 = vmatprep.subr.mxu0 0.0
        %392 = vmatpush1.msra.mxu0 0.0
        %393 = vmatprep.subr.mxu0 0.0
        %394 = vmatpush1.msra.mxu0 0.0
        %395 = vmatprep.subr.mxu0 0.0
        %396 = vmatpush1.msra.mxu0 0.0
        %397 = vmatprep.subr.mxu0 0.0
        %398 = vmatpush1.msra.mxu0 0.0
        %399 = vmatprep.subr.mxu0 0.0
        %400 = vmatpush1.msra.mxu0 0.0
        %401 = vmatprep.subr.mxu0 0.0
        %402 = vmatpush1.msra.mxu0 0.0
        %403 = vmatprep.subr.mxu0 0.0
        %404 = vmatpush1.msra.mxu0 0.0
        %405 = vmatprep.subr.mxu0 0.0
        %406 = vmatpush1.msra.mxu0 0.0
        %407 = vmatprep.subr.mxu0 0.0
        %408 = vmatpush1.msra.mxu0 0.0
        %409 = vmatprep.subr.mxu0 0.0
        %410 = vmatpush1.msra.mxu0 0.0
        %411 = vmatprep.subr.mxu0 0.0
        %412 = vmatpush1.msra.mxu0 0.0
        %413 = vmatprep.subr.mxu0 0.0
        %414 = vmatpush1.msra.mxu0 0.0
        %415 = vmatprep.subr.mxu0 0.0
        %416 = vmatpush1.msra.mxu0 0.0
        %417 = vmatprep.subr.mxu0 0.0
        %418 = vmatpush1.msra.mxu0 0.0
        %419 = vmatprep.subr.mxu0 0.0
        %420 = vmatpush1.msra.mxu0 0.0
        %421 = vmatprep.subr.mxu0 0.0
        %422 = vmatpush1.msra.mxu0 0.0
        %423 = vmatprep.subr.mxu0 0.0
        %424 = vmatpush1.msra.mxu0 0.0
        %425 = vmatprep.subr.mxu0 0.0
        %426 = vmatpush1.msra.mxu0 0.0
        %427 = vmatprep.subr.mxu0 0.0
        %428 = vmatpush1.msra.mxu0 0.0
        %429 = vmatprep.subr.mxu0 0.0
        %430 = vmatpush1.msra.mxu0 0.0
        %431 = vmatprep.subr.mxu0 0.0
        %432 = vmatpush1.msra.mxu0 0.0
        %433 = vmatprep.mubr.f32.mxu0 0.0
        %434 = vmatmul.mubr.f32.gmra.mrb[0].mxu0 %v269
        %v435 = vpop.f32.mrb[0].mxu0
        %v436 = vadd.f32 %v258, %v435
        %v437 = vpop.f32.mrb[0].mxu0
        %v438 = vadd.f32 %v262, %v437
        %439 = vmatprep.mubr.f32.mxu0 0.0
        %440 = vmatmul.mubr.f32.gmra.mrb[0].mxu0 %v272
        %v441 = vpop.f32.mrb[0].mxu0
        %v442 = vadd.f32 %v258, %v441
        %v443 = vpop.f32.mrb[0].mxu0
        %v444 = vadd.f32 %v262, %v443
        %445 = vmatprep.mubr.f32.mxu0 0.0
        %446 = vmatmul.mubr.f32.gmra.mrb[0].mxu0 %v275
        %v447 = vpop.f32.mrb[0].mxu0
        %v448 = vadd.f32 %v258, %v447
        %v449 = vpop.f32.mrb[0].mxu0
        %v450 = vadd.f32 %v262, %v449
        %451 = vmatprep.mubr.f32.mxu0 0.0
        %452 = vmatmul.mubr.f32.gmra.mrb[0].mxu0 %v278
        %v453 = vpop.f32.mrb[0].mxu0
        %v454 = vadd.f32 %v258, %v453
        %v455 = vpop.f32.mrb[0].mxu0
        %v456 = vadd.f32 %v262, %v455
        %457 = vdwg.mxu0
        %458 = vst [vmem:[#allocation2] sm:$0xff] %v347
        %459 = vst [vmem:[#allocation2 + $0x8] sm:$0xff] %v349
        %460 = vst [vmem:[#allocation2 + $0x10] sm:$0xff] %v436
        %461 = vst [vmem:[#allocation2 + $0x18] sm:$0xff] %v438
        %462 = vst [vmem:[#allocation2 + $0x20] sm:$0xff] %v353
        %463 = vst [vmem:[#allocation2 + $0x28] sm:$0xff] %v355
        %464 = vst [vmem:[#allocation2 + $0x30] sm:$0xff] %v442
        %465 = vst [vmem:[#allocation2 + $0x38] sm:$0xff] %v444
        %466 = vst [vmem:[#allocation2 + $0x40] sm:$0xff] %v359
        %467 = vst [vmem:[#allocation2 + $0x48] sm:$0xff] %v361
        %468 = vst [vmem:[#allocation2 + $0x50] sm:$0xff] %v448
        %469 = vst [vmem:[#allocation2 + $0x58] sm:$0xff] %v450
        %470 = vst [vmem:[#allocation2 + $0x60] sm:$0xff] %v365
        %471 = vst [vmem:[#allocation2 + $0x68] sm:$0xff] %v367
        %472 = vst [vmem:[#allocation2 + $0x70] sm:$0xff] %v454
        %473 = vst [vmem:[#allocation2 + $0x78] sm:$0xff] %v456
        %v474 = vld [vmem:[#allocation3] sm:$0xff]
        %v475 = vld [vmem:[#allocation4] sm:$0xff]
        %s476 = smul.u32 0, 4
        %s477 = smul.addr %s476, 8
        %s478 = scalar_lea.vmem [#allocation2], %s477
        %v479 = vld [vmem:[%s478] sm:$0xff]
        %v480 = vld [vmem:[%s478 + $0x8] sm:$0xff]
        %v481 = vld [vmem:[%s478 + $0x10] sm:$0xff]
        %v482 = vld [vmem:[%s478 + $0x18] sm:$0xff]
        %v483 = vld [vmem:[#allocation5] sm:$0xff]
        %v484 = vld [vmem:[#allocation5 + $0x8] sm:$0xff]
        %v485 = vld [vmem:[#allocation5 + $0x10] sm:$0xff]
        %v486 = vld [vmem:[#allocation5 + $0x18] sm:$0xff]
        %v487 = vld [vmem:[#allocation5 + $0x20] sm:$0xff]
        %v488 = vld [vmem:[#allocation5 + $0x28] sm:$0xff]
        %v489 = vld [vmem:[#allocation5 + $0x30] sm:$0xff]
        %v490 = vld [vmem:[#allocation5 + $0x38] sm:$0xff]
        %v491 = vld [vmem:[#allocation5 + $0x40] sm:$0xff]
        %v492 = vld [vmem:[#allocation5 + $0x48] sm:$0xff]
        %v493 = vld [vmem:[#allocation5 + $0x50] sm:$0xff]
        %v494 = vld [vmem:[#allocation5 + $0x58] sm:$0xff]
        %v495 = vld [vmem:[#allocation5 + $0x60] sm:$0xff]
        %v496 = vld [vmem:[#allocation5 + $0x68] sm:$0xff]
        %v497 = vld [vmem:[#allocation5 + $0x70] sm:$0xff]
        %v498 = vld [vmem:[#allocation5 + $0x78] sm:$0xff]
        %v499 = vld [vmem:[#allocation5 + $0x80] sm:$0xff]
        %v500 = vld [vmem:[#allocation5 + $0x88] sm:$0xff]
        %v501 = vld [vmem:[#allocation5 + $0x90] sm:$0xff]
        %v502 = vld [vmem:[#allocation5 + $0x98] sm:$0xff]
        %v503 = vld [vmem:[#allocation5 + $0xa0] sm:$0xff]
        %v504 = vld [vmem:[#allocation5 + $0xa8] sm:$0xff]
        %v505 = vld [vmem:[#allocation5 + $0xb0] sm:$0xff]
        %v506 = vld [vmem:[#allocation5 + $0xb8] sm:$0xff]
        %v507 = vld [vmem:[#allocation5 + $0xc0] sm:$0xff]
        %v508 = vld [vmem:[#allocation5 + $0xc8] sm:$0xff]
        %v509 = vld [vmem:[#allocation5 + $0xd0] sm:$0xff]
        %v510 = vld [vmem:[#allocation5 + $0xd8] sm:$0xff]
        %v511 = vld [vmem:[#allocation5 + $0xe0] sm:$0xff]
        %v512 = vld [vmem:[#allocation5 + $0xe8] sm:$0xff]
        %v513 = vld [vmem:[#allocation5 + $0xf0] sm:$0xff]
        %v514 = vld [vmem:[#allocation5 + $0xf8] sm:$0xff]
        %v515 = vld [vmem:[#allocation5 + $0x100] sm:$0xff]
        %v516 = vld [vmem:[#allocation5 + $0x108] sm:$0xff]
        %v517 = vld [vmem:[#allocation5 + $0x110] sm:$0xff]
        %v518 = vld [vmem:[#allocation5 + $0x118] sm:$0xff]
        %v519 = vld [vmem:[#allocation5 + $0x120] sm:$0xff]
        %v520 = vld [vmem:[#allocation5 + $0x128] sm:$0xff]
        %v521 = vld [vmem:[#allocation5 + $0x130] sm:$0xff]
        %v522 = vld [vmem:[#allocation5 + $0x138] sm:$0xff]
        %v523 = vld [vmem:[#allocation5 + $0x140] sm:$0xff]
        %v524 = vld [vmem:[#allocation5 + $0x148] sm:$0xff]
        %v525 = vld [vmem:[#allocation5 + $0x150] sm:$0xff]
        %v526 = vld [vmem:[#allocation5 + $0x158] sm:$0xff]
        %v527 = vld [vmem:[#allocation5 + $0x160] sm:$0xff]
        %v528 = vld [vmem:[#allocation5 + $0x168] sm:$0xff]
        %v529 = vld [vmem:[#allocation5 + $0x170] sm:$0xff]
        %v530 = vld [vmem:[#allocation5 + $0x178] sm:$0xff]
        %v531 = vld [vmem:[#allocation5 + $0x180] sm:$0xff]
        %v532 = vld [vmem:[#allocation5 + $0x188] sm:$0xff]
        %v533 = vld [vmem:[#allocation5 + $0x190] sm:$0xff]
        %v534 = vld [vmem:[#allocation5 + $0x198] sm:$0xff]
        %v535 = vld [vmem:[#allocation5 + $0x1a0] sm:$0xff]
        %v536 = vld [vmem:[#allocation5 + $0x1a8] sm:$0xff]
        %v537 = vld [vmem:[#allocation5 + $0x1b0] sm:$0xff]
        %v538 = vld [vmem:[#allocation5 + $0x1b8] sm:$0xff]
        %v539 = vld [vmem:[#allocation5 + $0x1c0] sm:$0xff]
        %v540 = vld [vmem:[#allocation5 + $0x1c8] sm:$0xff]
        %v541 = vld [vmem:[#allocation5 + $0x1d0] sm:$0xff]
        %v542 = vld [vmem:[#allocation5 + $0x1d8] sm:$0xff]
        %v543 = vld [vmem:[#allocation5 + $0x1e0] sm:$0xff]
        %v544 = vld [vmem:[#allocation5 + $0x1e8] sm:$0xff]
        %v545 = vld [vmem:[#allocation5 + $0x1f0] sm:$0xff]
        %v546 = vld [vmem:[#allocation5 + $0x1f8] sm:$0xff]
        %547 = vmatprep.subr.mxu0 %v484
        %548 = vmatpush1.msra.mxu0 %v483
        %549 = vmatprep.subr.mxu0 %v488
        %550 = vmatpush1.msra.mxu0 %v487
        %551 = vmatprep.subr.mxu0 %v492
        %552 = vmatpush1.msra.mxu0 %v491
        %553 = vmatprep.subr.mxu0 %v496
        %554 = vmatpush1.msra.mxu0 %v495
        %555 = vmatprep.subr.mxu0 %v500
        %556 = vmatpush1.msra.mxu0 %v499
        %557 = vmatprep.subr.mxu0 %v504
        %558 = vmatpush1.msra.mxu0 %v503
        %559 = vmatprep.subr.mxu0 %v508
        %560 = vmatpush1.msra.mxu0 %v507
        %561 = vmatprep.subr.mxu0 %v512
        %562 = vmatpush1.msra.mxu0 %v511
        %563 = vmatprep.subr.mxu0 %v516
        %564 = vmatpush1.msra.mxu0 %v515
        %565 = vmatprep.subr.mxu0 %v520
        %566 = vmatpush1.msra.mxu0 %v519
        %567 = vmatprep.subr.mxu0 %v524
        %568 = vmatpush1.msra.mxu0 %v523
        %569 = vmatprep.subr.mxu0 %v528
        %570 = vmatpush1.msra.mxu0 %v527
        %571 = vmatprep.subr.mxu0 %v532
        %572 = vmatpush1.msra.mxu0 %v531
        %573 = vmatprep.subr.mxu0 %v536
        %574 = vmatpush1.msra.mxu0 %v535
        %575 = vmatprep.subr.mxu0 %v540
        %576 = vmatpush1.msra.mxu0 %v539
        %577 = vmatprep.subr.mxu0 %v544
        %578 = vmatpush1.msra.mxu0 %v543
        %579 = vmatprep.subr.mxu0 0.0
        %580 = vmatpush1.msra.mxu0 0.0
        %581 = vmatprep.subr.mxu0 0.0
        %582 = vmatpush1.msra.mxu0 0.0
        %583 = vmatprep.subr.mxu0 0.0
        %584 = vmatpush1.msra.mxu0 0.0
        %585 = vmatprep.subr.mxu0 0.0
        %586 = vmatpush1.msra.mxu0 0.0
        %587 = vmatprep.subr.mxu0 0.0
        %588 = vmatpush1.msra.mxu0 0.0
        %589 = vmatprep.subr.mxu0 0.0
        %590 = vmatpush1.msra.mxu0 0.0
        %591 = vmatprep.subr.mxu0 0.0
        %592 = vmatpush1.msra.mxu0 0.0
        %593 = vmatprep.subr.mxu0 0.0
        %594 = vmatpush1.msra.mxu0 0.0
        %595 = vmatprep.subr.mxu0 0.0
        %596 = vmatpush1.msra.mxu0 0.0
        %597 = vmatprep.subr.mxu0 0.0
        %598 = vmatpush1.msra.mxu0 0.0
        %599 = vmatprep.subr.mxu0 0.0
        %600 = vmatpush1.msra.mxu0 0.0
        %601 = vmatprep.subr.mxu0 0.0
        %602 = vmatpush1.msra.mxu0 0.0
        %603 = vmatprep.subr.mxu0 0.0
        %604 = vmatpush1.msra.mxu0 0.0
        %605 = vmatprep.subr.mxu0 0.0
        %606 = vmatpush1.msra.mxu0 0.0
        %607 = vmatprep.subr.mxu0 0.0
        %608 = vmatpush1.msra.mxu0 0.0
        %609 = vmatprep.subr.mxu0 0.0
        %610 = vmatpush1.msra.mxu0 0.0
        %611 = vmatprep.mubr.f32.mxu0 0.0
        %612 = vmatmul.mubr.f32.gmra.mrb[0].mxu0 %v474
        %v613 = vpop.f32.mrb[0].mxu0
        %v614 = vadd.f32 0.0, %v613
        %v615 = vpop.f32.mrb[0].mxu0
        %v616 = vadd.f32 0.0, %v615
        %617 = vdwg.mxu0
        %618 = vmatprep.subr.mxu0 %v486
        %619 = vmatpush1.msra.mxu0 %v485
        %620 = vmatprep.subr.mxu0 %v490
        %621 = vmatpush1.msra.mxu0 %v489
        %622 = vmatprep.subr.mxu0 %v494
        %623 = vmatpush1.msra.mxu0 %v493
        %624 = vmatprep.subr.mxu0 %v498
        %625 = vmatpush1.msra.mxu0 %v497
        %626 = vmatprep.subr.mxu0 %v502
        %627 = vmatpush1.msra.mxu0 %v501
        %628 = vmatprep.subr.mxu0 %v506
        %629 = vmatpush1.msra.mxu0 %v505
        %630 = vmatprep.subr.mxu0 %v510
        %631 = vmatpush1.msra.mxu0 %v509
        %632 = vmatprep.subr.mxu0 %v514
        %633 = vmatpush1.msra.mxu0 %v513
        %634 = vmatprep.subr.mxu0 %v518
        %635 = vmatpush1.msra.mxu0 %v517
        %636 = vmatprep.subr.mxu0 %v522
        %637 = vmatpush1.msra.mxu0 %v521
        %638 = vmatprep.subr.mxu0 %v526
        %639 = vmatpush1.msra.mxu0 %v525
        %640 = vmatprep.subr.mxu0 %v530
        %641 = vmatpush1.msra.mxu0 %v529
        %642 = vmatprep.subr.mxu0 %v534
        %643 = vmatpush1.msra.mxu0 %v533
        %644 = vmatprep.subr.mxu0 %v538
        %645 = vmatpush1.msra.mxu0 %v537
        %646 = vmatprep.subr.mxu0 %v542
        %647 = vmatpush1.msra.mxu0 %v541
        %648 = vmatprep.subr.mxu0 %v546
        %649 = vmatpush1.msra.mxu0 %v545
        %650 = vmatprep.subr.mxu0 0.0
        %651 = vmatpush1.msra.mxu0 0.0
        %652 = vmatprep.subr.mxu0 0.0
        %653 = vmatpush1.msra.mxu0 0.0
        %654 = vmatprep.subr.mxu0 0.0
        %655 = vmatpush1.msra.mxu0 0.0
        %656 = vmatprep.subr.mxu0 0.0
        %657 = vmatpush1.msra.mxu0 0.0
        %658 = vmatprep.subr.mxu0 0.0
        %659 = vmatpush1.msra.mxu0 0.0
        %660 = vmatprep.subr.mxu0 0.0
        %661 = vmatpush1.msra.mxu0 0.0
        %662 = vmatprep.subr.mxu0 0.0
        %663 = vmatpush1.msra.mxu0 0.0
        %664 = vmatprep.subr.mxu0 0.0
        %665 = vmatpush1.msra.mxu0 0.0
        %666 = vmatprep.subr.mxu0 0.0
        %667 = vmatpush1.msra.mxu0 0.0
        %668 = vmatprep.subr.mxu0 0.0
        %669 = vmatpush1.msra.mxu0 0.0
        %670 = vmatprep.subr.mxu0 0.0
        %671 = vmatpush1.msra.mxu0 0.0
        %672 = vmatprep.subr.mxu0 0.0
        %673 = vmatpush1.msra.mxu0 0.0
        %674 = vmatprep.subr.mxu0 0.0
        %675 = vmatpush1.msra.mxu0 0.0
        %676 = vmatprep.subr.mxu0 0.0
        %677 = vmatpush1.msra.mxu0 0.0
        %678 = vmatprep.subr.mxu0 0.0
        %679 = vmatpush1.msra.mxu0 0.0
        %680 = vmatprep.subr.mxu0 0.0
        %681 = vmatpush1.msra.mxu0 0.0
        %682 = vmatprep.mubr.f32.mxu0 0.0
        %683 = vmatmul.mubr.f32.gmra.mrb[0].mxu0 %v474
        %v684 = vpop.f32.mrb[0].mxu0
        %v685 = vadd.f32 0.0, %v684
        %v686 = vpop.f32.mrb[0].mxu0
        %v687 = vadd.f32 0.0, %v686
        %688 = vdwg.mxu0
        %v689 = vadd.f32 %v479, %v614
        %v690 = vadd.f32 %v480, %v616
        %v691 = vadd.f32 %v481, %v685
        %v692 = vadd.f32 %v482, %v687
        %v693 = vxor.u32 %v689, 2147483648
        %v694 = vxor.u32 %v690, 2147483648
        %v695 = vxor.u32 %v691, 2147483648
        %v696 = vmul.f32 %v693, 1.442695
        %v697 = vpow.pop %v696
        %v698 = vmul.f32 %v694, 1.442695
        %v699 = vpow.pop %v698
        %v700 = vmul.f32 %v695, 1.442695
        %v701 = vpow.pop %v700
        %v702 = vadd.f32 %v697, 1.0
        %v703 = vadd.f32 %v699, 1.0
        %v704 = vadd.f32 %v701, 1.0
        %v705 = vrcp.pop %v702
        %v706 = vmul.f32 1.0, %v705
        %v707 = vrcp.pop %v703
        %v708 = vmul.f32 1.0, %v707
        %v709 = vrcp.pop %v704
        %v710 = vmul.f32 1.0, %v709
        %v711 = vtanh.pop %v692
        %v712 = vmul.f32 %v708, %v475
        %v713 = vmul.f32 %v706, %v711
        %v714 = vadd.f32 %v712, %v713
        %v715 = vtanh.pop %v714
        %v716 = vmul.f32 %v710, %v715
        %s717 = smul.u32 1, 4
        %s718 = smul.addr %s717, 8
        %s719 = scalar_lea.vmem [#allocation2], %s718
        %v720 = vld [vmem:[%s719] sm:$0xff]
        %v721 = vld [vmem:[%s719 + $0x8] sm:$0xff]
        %v722 = vld [vmem:[%s719 + $0x10] sm:$0xff]
        %v723 = vld [vmem:[%s719 + $0x18] sm:$0xff]
        %724 = vmatprep.subr.mxu0 %v484
        %725 = vmatpush1.msra.mxu0 %v483
        %726 = vmatprep.subr.mxu0 %v488
        %727 = vmatpush1.msra.mxu0 %v487
        %728 = vmatprep.subr.mxu0 %v492
        %729 = vmatpush1.msra.mxu0 %v491
        %730 = vmatprep.subr.mxu0 %v496
        %731 = vmatpush1.msra.mxu0 %v495
        %732 = vmatprep.subr.mxu0 %v500
        %733 = vmatpush1.msra.mxu0 %v499
        %734 = vmatprep.subr.mxu0 %v504
        %735 = vmatpush1.msra.mxu0 %v503
        %736 = vmatprep.subr.mxu0 %v508
        %737 = vmatpush1.msra.mxu0 %v507
        %738 = vmatprep.subr.mxu0 %v512
        %739 = vmatpush1.msra.mxu0 %v511
        %740 = vmatprep.subr.mxu0 %v516
        %741 = vmatpush1.msra.mxu0 %v515
        %742 = vmatprep.subr.mxu0 %v520
        %743 = vmatpush1.msra.mxu0 %v519
        %744 = vmatprep.subr.mxu0 %v524
        %745 = vmatpush1.msra.mxu0 %v523
        %746 = vmatprep.subr.mxu0 %v528
        %747 = vmatpush1.msra.mxu0 %v527
        %748 = vmatprep.subr.mxu0 %v532
        %749 = vmatpush1.msra.mxu0 %v531
        %750 = vmatprep.subr.mxu0 %v536
        %751 = vmatpush1.msra.mxu0 %v535
        %752 = vmatprep.subr.mxu0 %v540
        %753 = vmatpush1.msra.mxu0 %v539
        %754 = vmatprep.subr.mxu0 %v544
        %755 = vmatpush1.msra.mxu0 %v543
        %756 = vmatprep.subr.mxu0 0.0
        %757 = vmatpush1.msra.mxu0 0.0
        %758 = vmatprep.subr.mxu0 0.0
        %759 = vmatpush1.msra.mxu0 0.0
        %760 = vmatprep.subr.mxu0 0.0
        %761 = vmatpush1.msra.mxu0 0.0
        %762 = vmatprep.subr.mxu0 0.0
        %763 = vmatpush1.msra.mxu0 0.0
        %764 = vmatprep.subr.mxu0 0.0
        %765 = vmatpush1.msra.mxu0 0.0
        %766 = vmatprep.subr.mxu0 0.0
        %767 = vmatpush1.msra.mxu0 0.0
        %768 = vmatprep.subr.mxu0 0.0
        %769 = vmatpush1.msra.mxu0 0.0
        %770 = vmatprep.subr.mxu0 0.0
        %771 = vmatpush1.msra.mxu0 0.0
        %772 = vmatprep.subr.mxu0 0.0
        %773 = vmatpush1.msra.mxu0 0.0
        %774 = vmatprep.subr.mxu0 0.0
        %775 = vmatpush1.msra.mxu0 0.0
        %776 = vmatprep.subr.mxu0 0.0
        %777 = vmatpush1.msra.mxu0 0.0
        %778 = vmatprep.subr.mxu0 0.0
        %779 = vmatpush1.msra.mxu0 0.0
        %780 = vmatprep.subr.mxu0 0.0
        %781 = vmatpush1.msra.mxu0 0.0
        %782 = vmatprep.subr.mxu0 0.0
        %783 = vmatpush1.msra.mxu0 0.0
        %784 = vmatprep.subr.mxu0 0.0
        %785 = vmatpush1.msra.mxu0 0.0
        %786 = vmatprep.subr.mxu0 0.0
        %787 = vmatpush1.msra.mxu0 0.0
        %788 = vmatprep.mubr.f32.mxu0 0.0
        %789 = vmatmul.mubr.f32.gmra.mrb[0].mxu0 %v716
        %v790 = vpop.f32.mrb[0].mxu0
        %v791 = vadd.f32 0.0, %v790
        %v792 = vpop.f32.mrb[0].mxu0
        %v793 = vadd.f32 0.0, %v792
        %794 = vdwg.mxu0
        %795 = vmatprep.subr.mxu0 %v486
        %796 = vmatpush1.msra.mxu0 %v485
        %797 = vmatprep.subr.mxu0 %v490
        %798 = vmatpush1.msra.mxu0 %v489
        %799 = vmatprep.subr.mxu0 %v494
        %800 = vmatpush1.msra.mxu0 %v493
        %801 = vmatprep.subr.mxu0 %v498
        %802 = vmatpush1.msra.mxu0 %v497
        %803 = vmatprep.subr.mxu0 %v502
        %804 = vmatpush1.msra.mxu0 %v501
        %805 = vmatprep.subr.mxu0 %v506
        %806 = vmatpush1.msra.mxu0 %v505
        %807 = vmatprep.subr.mxu0 %v510
        %808 = vmatpush1.msra.mxu0 %v509
        %809 = vmatprep.subr.mxu0 %v514
        %810 = vmatpush1.msra.mxu0 %v513
        %811 = vmatprep.subr.mxu0 %v518
        %812 = vmatpush1.msra.mxu0 %v517
        %813 = vmatprep.subr.mxu0 %v522
        %814 = vmatpush1.msra.mxu0 %v521
        %815 = vmatprep.subr.mxu0 %v526
        %816 = vmatpush1.msra.mxu0 %v525
        %817 = vmatprep.subr.mxu0 %v530
        %818 = vmatpush1.msra.mxu0 %v529
        %819 = vmatprep.subr.mxu0 %v534
        %820 = vmatpush1.msra.mxu0 %v533
        %821 = vmatprep.subr.mxu0 %v538
        %822 = vmatpush1.msra.mxu0 %v537
        %823 = vmatprep.subr.mxu0 %v542
        %824 = vmatpush1.msra.mxu0 %v541
        %825 = vmatprep.subr.mxu0 %v546
        %826 = vmatpush1.msra.mxu0 %v545
        %827 = vmatprep.subr.mxu0 0.0
        %828 = vmatpush1.msra.mxu0 0.0
        %829 = vmatprep.subr.mxu0 0.0
        %830 = vmatpush1.msra.mxu0 0.0
        %831 = vmatprep.subr.mxu0 0.0
        %832 = vmatpush1.msra.mxu0 0.0
        %833 = vmatprep.subr.mxu0 0.0
        %834 = vmatpush1.msra.mxu0 0.0
        %835 = vmatprep.subr.mxu0 0.0
        %836 = vmatpush1.msra.mxu0 0.0
        %837 = vmatprep.subr.mxu0 0.0
        %838 = vmatpush1.msra.mxu0 0.0
        %839 = vmatprep.subr.mxu0 0.0
        %840 = vmatpush1.msra.mxu0 0.0
        %841 = vmatprep.subr.mxu0 0.0
        %842 = vmatpush1.msra.mxu0 0.0
        %843 = vmatprep.subr.mxu0 0.0
        %844 = vmatpush1.msra.mxu0 0.0
        %845 = vmatprep.subr.mxu0 0.0
        %846 = vmatpush1.msra.mxu0 0.0
        %847 = vmatprep.subr.mxu0 0.0
        %848 = vmatpush1.msra.mxu0 0.0
        %849 = vmatprep.subr.mxu0 0.0
        %850 = vmatpush1.msra.mxu0 0.0
        %851 = vmatprep.subr.mxu0 0.0
        %852 = vmatpush1.msra.mxu0 0.0
        %853 = vmatprep.subr.mxu0 0.0
        %854 = vmatpush1.msra.mxu0 0.0
        %855 = vmatprep.subr.mxu0 0.0
        %856 = vmatpush1.msra.mxu0 0.0
        %857 = vmatprep.subr.mxu0 0.0
        %858 = vmatpush1.msra.mxu0 0.0
        %859 = vmatprep.mubr.f32.mxu0 0.0
        %860 = vmatmul.mubr.f32.gmra.mrb[0].mxu0 %v716
        %v861 = vpop.f32.mrb[0].mxu0
        %v862 = vadd.f32 0.0, %v861
        %v863 = vpop.f32.mrb[0].mxu0
        %v864 = vadd.f32 0.0, %v863
        %865 = vdwg.mxu0
        %v866 = vadd.f32 %v720, %v791
        %v867 = vadd.f32 %v721, %v793
        %v868 = vadd.f32 %v722, %v862
        %v869 = vadd.f32 %v723, %v864
        %v870 = vxor.u32 %v866, 2147483648
        %v871 = vxor.u32 %v867, 2147483648
        %v872 = vxor.u32 %v868, 2147483648
        %v873 = vmul.f32 %v870, 1.442695
        %v874 = vpow.pop %v873
        %v875 = vmul.f32 %v871, 1.442695
        %v876 = vpow.pop %v875
        %v877 = vmul.f32 %v872, 1.442695
        %v878 = vpow.pop %v877
        %v879 = vadd.f32 %v874, 1.0
        %v880 = vadd.f32 %v876, 1.0
        %v881 = vadd.f32 %v878, 1.0
        %v882 = vrcp.pop %v879
        %v883 = vmul.f32 1.0, %v882
        %v884 = vrcp.pop %v880
        %v885 = vmul.f32 1.0, %v884
        %v886 = vrcp.pop %v881
        %v887 = vmul.f32 1.0, %v886
        %v888 = vtanh.pop %v869
        %v889 = vmul.f32 %v885, %v714
        %v890 = vmul.f32 %v883, %v888
        %v891 = vadd.f32 %v889, %v890
        %v892 = vtanh.pop %v891
        %v893 = vmul.f32 %v887, %v892
        %s894 = smul.u32 2, 4
        %s895 = smul.addr %s894, 8
        %s896 = scalar_lea.vmem [#allocation2], %s895
        %v897 = vld [vmem:[%s896] sm:$0xff]
        %v898 = vld [vmem:[%s896 + $0x8] sm:$0xff]
        %v899 = vld [vmem:[%s896 + $0x10] sm:$0xff]
        %v900 = vld [vmem:[%s896 + $0x18] sm:$0xff]
        %901 = vmatprep.subr.mxu0 %v484
        %902 = vmatpush1.msra.mxu0 %v483
        %903 = vmatprep.subr.mxu0 %v488
        %904 = vmatpush1.msra.mxu0 %v487
        %905 = vmatprep.subr.mxu0 %v492
        %906 = vmatpush1.msra.mxu0 %v491
        %907 = vmatprep.subr.mxu0 %v496
        %908 = vmatpush1.msra.mxu0 %v495
        %909 = vmatprep.subr.mxu0 %v500
        %910 = vmatpush1.msra.mxu0 %v499
        %911 = vmatprep.subr.mxu0 %v504
        %912 = vmatpush1.msra.mxu0 %v503
        %913 = vmatprep.subr.mxu0 %v508
        %914 = vmatpush1.msra.mxu0 %v507
        %915 = vmatprep.subr.mxu0 %v512
        %916 = vmatpush1.msra.mxu0 %v511
        %917 = vmatprep.subr.mxu0 %v516
        %918 = vmatpush1.msra.mxu0 %v515
        %919 = vmatprep.subr.mxu0 %v520
        %920 = vmatpush1.msra.mxu0 %v519
        %921 = vmatprep.subr.mxu0 %v524
        %922 = vmatpush1.msra.mxu0 %v523
        %923 = vmatprep.subr.mxu0 %v528
        %924 = vmatpush1.msra.mxu0 %v527
        %925 = vmatprep.subr.mxu0 %v532
        %926 = vmatpush1.msra.mxu0 %v531
        %927 = vmatprep.subr.mxu0 %v536
        %928 = vmatpush1.msra.mxu0 %v535
        %929 = vmatprep.subr.mxu0 %v540
        %930 = vmatpush1.msra.mxu0 %v539
        %931 = vmatprep.subr.mxu0 %v544
        %932 = vmatpush1.msra.mxu0 %v543
        %933 = vmatprep.subr.mxu0 0.0
        %934 = vmatpush1.msra.mxu0 0.0
        %935 = vmatprep.subr.mxu0 0.0
        %936 = vmatpush1.msra.mxu0 0.0
        %937 = vmatprep.subr.mxu0 0.0
        %938 = vmatpush1.msra.mxu0 0.0
        %939 = vmatprep.subr.mxu0 0.0
        %940 = vmatpush1.msra.mxu0 0.0
        %941 = vmatprep.subr.mxu0 0.0
        %942 = vmatpush1.msra.mxu0 0.0
        %943 = vmatprep.subr.mxu0 0.0
        %944 = vmatpush1.msra.mxu0 0.0
        %945 = vmatprep.subr.mxu0 0.0
        %946 = vmatpush1.msra.mxu0 0.0
        %947 = vmatprep.subr.mxu0 0.0
        %948 = vmatpush1.msra.mxu0 0.0
        %949 = vmatprep.subr.mxu0 0.0
        %950 = vmatpush1.msra.mxu0 0.0
        %951 = vmatprep.subr.mxu0 0.0
        %952 = vmatpush1.msra.mxu0 0.0
        %953 = vmatprep.subr.mxu0 0.0
        %954 = vmatpush1.msra.mxu0 0.0
        %955 = vmatprep.subr.mxu0 0.0
        %956 = vmatpush1.msra.mxu0 0.0
        %957 = vmatprep.subr.mxu0 0.0
        %958 = vmatpush1.msra.mxu0 0.0
        %959 = vmatprep.subr.mxu0 0.0
        %960 = vmatpush1.msra.mxu0 0.0
        %961 = vmatprep.subr.mxu0 0.0
        %962 = vmatpush1.msra.mxu0 0.0
        %963 = vmatprep.subr.mxu0 0.0
        %964 = vmatpush1.msra.mxu0 0.0
        %965 = vmatprep.mubr.f32.mxu0 0.0
        %966 = vmatmul.mubr.f32.gmra.mrb[0].mxu0 %v893
        %v967 = vpop.f32.mrb[0].mxu0
        %v968 = vadd.f32 0.0, %v967
        %v969 = vpop.f32.mrb[0].mxu0
        %v970 = vadd.f32 0.0, %v969
        %971 = vdwg.mxu0
        %972 = vmatprep.subr.mxu0 %v486
        %973 = vmatpush1.msra.mxu0 %v485
        %974 = vmatprep.subr.mxu0 %v490
        %975 = vmatpush1.msra.mxu0 %v489
        %976 = vmatprep.subr.mxu0 %v494
        %977 = vmatpush1.msra.mxu0 %v493
        %978 = vmatprep.subr.mxu0 %v498
        %979 = vmatpush1.msra.mxu0 %v497
        %980 = vmatprep.subr.mxu0 %v502
        %981 = vmatpush1.msra.mxu0 %v501
        %982 = vmatprep.subr.mxu0 %v506
        %983 = vmatpush1.msra.mxu0 %v505
        %984 = vmatprep.subr.mxu0 %v510
        %985 = vmatpush1.msra.mxu0 %v509
        %986 = vmatprep.subr.mxu0 %v514
        %987 = vmatpush1.msra.mxu0 %v513
        %988 = vmatprep.subr.mxu0 %v518
        %989 = vmatpush1.msra.mxu0 %v517
        %990 = vmatprep.subr.mxu0 %v522
        %991 = vmatpush1.msra.mxu0 %v521
        %992 = vmatprep.subr.mxu0 %v526
        %993 = vmatpush1.msra.mxu0 %v525
        %994 = vmatprep.subr.mxu0 %v530
        %995 = vmatpush1.msra.mxu0 %v529
        %996 = vmatprep.subr.mxu0 %v534
        %997 = vmatpush1.msra.mxu0 %v533
        %998 = vmatprep.subr.mxu0 %v538
        %999 = vmatpush1.msra.mxu0 %v537
        %1000 = vmatprep.subr.mxu0 %v542
        %1001 = vmatpush1.msra.mxu0 %v541
        %1002 = vmatprep.subr.mxu0 %v546
        %1003 = vmatpush1.msra.mxu0 %v545
        %1004 = vmatprep.subr.mxu0 0.0
        %1005 = vmatpush1.msra.mxu0 0.0
        %1006 = vmatprep.subr.mxu0 0.0
        %1007 = vmatpush1.msra.mxu0 0.0
        %1008 = vmatprep.subr.mxu0 0.0
        %1009 = vmatpush1.msra.mxu0 0.0
        %1010 = vmatprep.subr.mxu0 0.0
        %1011 = vmatpush1.msra.mxu0 0.0
        %1012 = vmatprep.subr.mxu0 0.0
        %1013 = vmatpush1.msra.mxu0 0.0
        %1014 = vmatprep.subr.mxu0 0.0
        %1015 = vmatpush1.msra.mxu0 0.0
        %1016 = vmatprep.subr.mxu0 0.0
        %1017 = vmatpush1.msra.mxu0 0.0
        %1018 = vmatprep.subr.mxu0 0.0
        %1019 = vmatpush1.msra.mxu0 0.0
        %1020 = vmatprep.subr.mxu0 0.0
        %1021 = vmatpush1.msra.mxu0 0.0
        %1022 = vmatprep.subr.mxu0 0.0
        %1023 = vmatpush1.msra.mxu0 0.0
        %1024 = vmatprep.subr.mxu0 0.0
        %1025 = vmatpush1.msra.mxu0 0.0
        %1026 = vmatprep.subr.mxu0 0.0
        %1027 = vmatpush1.msra.mxu0 0.0
        %1028 = vmatprep.subr.mxu0 0.0
        %1029 = vmatpush1.msra.mxu0 0.0
        %1030 = vmatprep.subr.mxu0 0.0
        %1031 = vmatpush1.msra.mxu0 0.0
        %1032 = vmatprep.subr.mxu0 0.0
        %1033 = vmatpush1.msra.mxu0 0.0
        %1034 = vmatprep.subr.mxu0 0.0
        %1035 = vmatpush1.msra.mxu0 0.0
        %1036 = vmatprep.mubr.f32.mxu0 0.0
        %1037 = vmatmul.mubr.f32.gmra.mrb[0].mxu0 %v893
        %v1038 = vpop.f32.mrb[0].mxu0
        %v1039 = vadd.f32 0.0, %v1038
        %v1040 = vpop.f32.mrb[0].mxu0
        %v1041 = vadd.f32 0.0, %v1040
        %1042 = vdwg.mxu0
        %v1043 = vadd.f32 %v897, %v968
        %v1044 = vadd.f32 %v898, %v970
        %v1045 = vadd.f32 %v899, %v1039
        %v1046 = vadd.f32 %v900, %v1041
        %v1047 = vxor.u32 %v1043, 2147483648
        %v1048 = vxor.u32 %v1044, 2147483648
        %v1049 = vxor.u32 %v1045, 2147483648
        %v1050 = vmul.f32 %v1047, 1.442695
        %v1051 = vpow.pop %v1050
        %v1052 = vmul.f32 %v1048, 1.442695
        %v1053 = vpow.pop %v1052
        %v1054 = vmul.f32 %v1049, 1.442695
        %v1055 = vpow.pop %v1054
        %v1056 = vadd.f32 %v1051, 1.0
        %v1057 = vadd.f32 %v1053, 1.0
        %v1058 = vadd.f32 %v1055, 1.0
        %v1059 = vrcp.pop %v1056
        %v1060 = vmul.f32 1.0, %v1059
        %v1061 = vrcp.pop %v1057
        %v1062 = vmul.f32 1.0, %v1061
        %v1063 = vrcp.pop %v1058
        %v1064 = vmul.f32 1.0, %v1063
        %v1065 = vtanh.pop %v1046
        %v1066 = vmul.f32 %v1062, %v891
        %v1067 = vmul.f32 %v1060, %v1065
        %v1068 = vadd.f32 %v1066, %v1067
        %v1069 = vtanh.pop %v1068
        %v1070 = vmul.f32 %v1064, %v1069
        %s1071 = smul.u32 3, 4
        %s1072 = smul.addr %s1071, 8
        %s1073 = scalar_lea.vmem [#allocation2], %s1072
        %v1074 = vld [vmem:[%s1073] sm:$0xff]
        %v1075 = vld [vmem:[%s1073 + $0x8] sm:$0xff]
        %v1076 = vld [vmem:[%s1073 + $0x10] sm:$0xff]
        %v1077 = vld [vmem:[%s1073 + $0x18] sm:$0xff]
        %1078 = vmatprep.subr.mxu0 %v484
        %1079 = vmatpush1.msra.mxu0 %v483
        %1080 = vmatprep.subr.mxu0 %v488
        %1081 = vmatpush1.msra.mxu0 %v487
        %1082 = vmatprep.subr.mxu0 %v492
        %1083 = vmatpush1.msra.mxu0 %v491
        %1084 = vmatprep.subr.mxu0 %v496
        %1085 = vmatpush1.msra.mxu0 %v495
        %1086 = vmatprep.subr.mxu0 %v500
        %1087 = vmatpush1.msra.mxu0 %v499
        %1088 = vmatprep.subr.mxu0 %v504
        %1089 = vmatpush1.msra.mxu0 %v503
        %1090 = vmatprep.subr.mxu0 %v508
        %1091 = vmatpush1.msra.mxu0 %v507
        %1092 = vmatprep.subr.mxu0 %v512
        %1093 = vmatpush1.msra.mxu0 %v511
        %1094 = vmatprep.subr.mxu0 %v516
        %1095 = vmatpush1.msra.mxu0 %v515
        %1096 = vmatprep.subr.mxu0 %v520
        %1097 = vmatpush1.msra.mxu0 %v519
        %1098 = vmatprep.subr.mxu0 %v524
        %1099 = vmatpush1.msra.mxu0 %v523
        %1100 = vmatprep.subr.mxu0 %v528
        %1101 = vmatpush1.msra.mxu0 %v527
        %1102 = vmatprep.subr.mxu0 %v532
        %1103 = vmatpush1.msra.mxu0 %v531
        %1104 = vmatprep.subr.mxu0 %v536
        %1105 = vmatpush1.msra.mxu0 %v535
        %1106 = vmatprep.subr.mxu0 %v540
        %1107 = vmatpush1.msra.mxu0 %v539
        %1108 = vmatprep.subr.mxu0 %v544
        %1109 = vmatpush1.msra.mxu0 %v543
        %1110 = vmatprep.subr.mxu0 0.0
        %1111 = vmatpush1.msra.mxu0 0.0
        %1112 = vmatprep.subr.mxu0 0.0
        %1113 = vmatpush1.msra.mxu0 0.0
        %1114 = vmatprep.subr.mxu0 0.0
        %1115 = vmatpush1.msra.mxu0 0.0
        %1116 = vmatprep.subr.mxu0 0.0
        %1117 = vmatpush1.msra.mxu0 0.0
        %1118 = vmatprep.subr.mxu0 0.0
        %1119 = vmatpush1.msra.mxu0 0.0
        %1120 = vmatprep.subr.mxu0 0.0
        %1121 = vmatpush1.msra.mxu0 0.0
        %1122 = vmatprep.subr.mxu0 0.0
        %1123 = vmatpush1.msra.mxu0 0.0
        %1124 = vmatprep.subr.mxu0 0.0
        %1125 = vmatpush1.msra.mxu0 0.0
        %1126 = vmatprep.subr.mxu0 0.0
        %1127 = vmatpush1.msra.mxu0 0.0
        %1128 = vmatprep.subr.mxu0 0.0
        %1129 = vmatpush1.msra.mxu0 0.0
        %1130 = vmatprep.subr.mxu0 0.0
        %1131 = vmatpush1.msra.mxu0 0.0
        %1132 = vmatprep.subr.mxu0 0.0
        %1133 = vmatpush1.msra.mxu0 0.0
        %1134 = vmatprep.subr.mxu0 0.0
        %1135 = vmatpush1.msra.mxu0 0.0
        %1136 = vmatprep.subr.mxu0 0.0
        %1137 = vmatpush1.msra.mxu0 0.0
        %1138 = vmatprep.subr.mxu0 0.0
        %1139 = vmatpush1.msra.mxu0 0.0
        %1140 = vmatprep.subr.mxu0 0.0
        %1141 = vmatpush1.msra.mxu0 0.0
        %1142 = vmatprep.mubr.f32.mxu0 0.0
        %1143 = vmatmul.mubr.f32.gmra.mrb[0].mxu0 %v1070
        %v1144 = vpop.f32.mrb[0].mxu0
        %v1145 = vadd.f32 0.0, %v1144
        %v1146 = vpop.f32.mrb[0].mxu0
        %v1147 = vadd.f32 0.0, %v1146
        %1148 = vdwg.mxu0
        %1149 = vmatprep.subr.mxu0 %v486
        %1150 = vmatpush1.msra.mxu0 %v485
        %1151 = vmatprep.subr.mxu0 %v490
        %1152 = vmatpush1.msra.mxu0 %v489
        %1153 = vmatprep.subr.mxu0 %v494
        %1154 = vmatpush1.msra.mxu0 %v493
        %1155 = vmatprep.subr.mxu0 %v498
        %1156 = vmatpush1.msra.mxu0 %v497
        %1157 = vmatprep.subr.mxu0 %v502
        %1158 = vmatpush1.msra.mxu0 %v501
        %1159 = vmatprep.subr.mxu0 %v506
        %1160 = vmatpush1.msra.mxu0 %v505
        %1161 = vmatprep.subr.mxu0 %v510
        %1162 = vmatpush1.msra.mxu0 %v509
        %1163 = vmatprep.subr.mxu0 %v514
        %1164 = vmatpush1.msra.mxu0 %v513
        %1165 = vmatprep.subr.mxu0 %v518
        %1166 = vmatpush1.msra.mxu0 %v517
        %1167 = vmatprep.subr.mxu0 %v522
        %1168 = vmatpush1.msra.mxu0 %v521
        %1169 = vmatprep.subr.mxu0 %v526
        %1170 = vmatpush1.msra.mxu0 %v525
        %1171 = vmatprep.subr.mxu0 %v530
        %1172 = vmatpush1.msra.mxu0 %v529
        %1173 = vmatprep.subr.mxu0 %v534
        %1174 = vmatpush1.msra.mxu0 %v533
        %1175 = vmatprep.subr.mxu0 %v538
        %1176 = vmatpush1.msra.mxu0 %v537
        %1177 = vmatprep.subr.mxu0 %v542
        %1178 = vmatpush1.msra.mxu0 %v541
        %1179 = vmatprep.subr.mxu0 %v546
        %1180 = vmatpush1.msra.mxu0 %v545
        %1181 = vmatprep.subr.mxu0 0.0
        %1182 = vmatpush1.msra.mxu0 0.0
        %1183 = vmatprep.subr.mxu0 0.0
        %1184 = vmatpush1.msra.mxu0 0.0
        %1185 = vmatprep.subr.mxu0 0.0
        %1186 = vmatpush1.msra.mxu0 0.0
        %1187 = vmatprep.subr.mxu0 0.0
        %1188 = vmatpush1.msra.mxu0 0.0
        %1189 = vmatprep.subr.mxu0 0.0
        %1190 = vmatpush1.msra.mxu0 0.0
        %1191 = vmatprep.subr.mxu0 0.0
        %1192 = vmatpush1.msra.mxu0 0.0
        %1193 = vmatprep.subr.mxu0 0.0
        %1194 = vmatpush1.msra.mxu0 0.0
        %1195 = vmatprep.subr.mxu0 0.0
        %1196 = vmatpush1.msra.mxu0 0.0
        %1197 = vmatprep.subr.mxu0 0.0
        %1198 = vmatpush1.msra.mxu0 0.0
        %1199 = vmatprep.subr.mxu0 0.0
        %1200 = vmatpush1.msra.mxu0 0.0
        %1201 = vmatprep.subr.mxu0 0.0
        %1202 = vmatpush1.msra.mxu0 0.0
        %1203 = vmatprep.subr.mxu0 0.0
        %1204 = vmatpush1.msra.mxu0 0.0
        %1205 = vmatprep.subr.mxu0 0.0
        %1206 = vmatpush1.msra.mxu0 0.0
        %1207 = vmatprep.subr.mxu0 0.0
        %1208 = vmatpush1.msra.mxu0 0.0
        %1209 = vmatprep.subr.mxu0 0.0
        %1210 = vmatpush1.msra.mxu0 0.0
        %1211 = vmatprep.subr.mxu0 0.0
        %1212 = vmatpush1.msra.mxu0 0.0
        %1213 = vmatprep.mubr.f32.mxu0 0.0
        %1214 = vmatmul.mubr.f32.gmra.mrb[0].mxu0 %v1070
        %v1215 = vpop.f32.mrb[0].mxu0
        %v1216 = vadd.f32 0.0, %v1215
        %v1217 = vpop.f32.mrb[0].mxu0
        %v1218 = vadd.f32 0.0, %v1217
        %1219 = vdwg.mxu0
        %v1220 = vadd.f32 %v1074, %v1145
        %v1221 = vadd.f32 %v1075, %v1147
        %v1222 = vadd.f32 %v1076, %v1216
        %v1223 = vadd.f32 %v1077, %v1218
        %v1224 = vxor.u32 %v1220, 2147483648
        %v1225 = vxor.u32 %v1221, 2147483648
        %v1226 = vxor.u32 %v1222, 2147483648
        %v1227 = vmul.f32 %v1224, 1.442695
        %v1228 = vpow.pop %v1227
        %v1229 = vmul.f32 %v1225, 1.442695
        %v1230 = vpow.pop %v1229
        %v1231 = vmul.f32 %v1226, 1.442695
        %v1232 = vpow.pop %v1231
        %v1233 = vadd.f32 %v1228, 1.0
        %v1234 = vadd.f32 %v1230, 1.0
        %v1235 = vadd.f32 %v1232, 1.0
        %v1236 = vrcp.pop %v1233
        %v1237 = vmul.f32 1.0, %v1236
        %v1238 = vrcp.pop %v1234
        %v1239 = vmul.f32 1.0, %v1238
        %v1240 = vrcp.pop %v1235
        %v1241 = vmul.f32 1.0, %v1240
        %v1242 = vtanh.pop %v1223
        %v1243 = vmul.f32 %v1239, %v1068
        %v1244 = vmul.f32 %v1237, %v1242
        %v1245 = vadd.f32 %v1243, %v1244
        %v1246 = vtanh.pop %v1245
        %v1247 = vmul.f32 %v1241, %v1246
        %1248 = vst [vmem:[#allocation3] sm:$0xff] %v1247
        %1249 = vst [vmem:[#allocation4] sm:$0xff] %v1245
        %1250 = vst [vmem:[#allocation8] sm:$0xff] %v1247
        %1251 = vst [vmem:[#allocation9] sm:$0xff] %v1245
        // Predicated region
        $region45: #{tpu_custom_call.1} parent=35 // pred_check
          %p1252 = pneg %p122
        $region46: #{tpu_custom_call.1} parent=35 // pred_check_branch
          %1254 = sbr.rel (%p1252) target = $region48
        $region47: #{tpu_custom_call.1} parent=35 // pred_region
          %s1256 = ssub.s32 128, 128
          %1257 = vsyncadd [#allocation7], %s1256
          %s1259 = sshll.u32 [#allocation8], 4
          %s1260 = int_to_ptr.vmem [resolvable:$true] %s1259
          %1262 = dma.vmem_to_hbm [thread:$0]  %s1260, 128, %s4, [#allocation7]
        $region48: #{tpu_custom_call.1} parent=35 // pred_fallthru
          _
        // Predicated region
        $region49: #{tpu_custom_call.1} parent=35 // pred_check
          %p1263 = pneg %p143
        $region50: #{tpu_custom_call.1} parent=35 // pred_check_branch
          %1265 = sbr.rel (%p1263) target = $region52
        $region51: #{tpu_custom_call.1} parent=35 // pred_region
          %s1267 = ssub.s32 128, 128
          %1268 = vsyncadd [#allocation10], %s1267
          %s1270 = sshll.u32 [#allocation9], 4
          %s1271 = int_to_ptr.vmem [resolvable:$true] %s1270
          %1273 = dma.vmem_to_hbm [thread:$0]  %s1271, 128, %s5, [#allocation10]
        $region52: #{tpu_custom_call.1} parent=35 // pred_fallthru
          _
        // Predicated region
        $region53: #{tpu_custom_call.1} parent=35 // pred_check
          %p1274 = pneg %p122
        $region54: #{tpu_custom_call.1} parent=35 // pred_check_branch
          %1276 = sbr.rel (%p1274) target = $region56
        $region55: #{tpu_custom_call.1} parent=35 // pred_region
          %1277 = dma.done [#allocation7], 128
        $region56: #{tpu_custom_call.1} parent=35 // pred_fallthru
          _
        // Predicated region
        $region57: #{tpu_custom_call.1} parent=35 // pred_check
          %p1278 = pneg %p143
        $region58: #{tpu_custom_call.1} parent=35 // pred_check_branch
          %1280 = sbr.rel (%p1278) target = $region60
        $region59: #{tpu_custom_call.1} parent=35 // pred_region
          %1281 = dma.done [#allocation10], 128
        $region60: #{tpu_custom_call.1} parent=35 // pred_fallthru
          _
      $region36: #{tpu_custom_call.1} parent=5 // pred_fallthru
        _
      %p1282 = scmp.le.s32.totalorder 2, %s15
      // Predicated region
      $region61: #{tpu_custom_call.1} parent=5 // pred_check
        %p1283 = pneg %p1282
      $region62: #{tpu_custom_call.1} parent=5 // pred_check_branch
        %1285 = sbr.rel (%p1283) target = $region64
      $region63: #{tpu_custom_call.1} parent=5 // pred_region
        %s1286 = ssub.s32 %s15, 2
      $region64: #{tpu_custom_call.1} parent=5 // pred_fallthru
        _
    $region6: #{tpu_custom_call.1} parent=1 // loop_footer
      %s19 = sadd.s32 1, %s15
    $region7: #{tpu_custom_call.1} parent=1 // loop_footer_branch
      %14 = sbr.rel target = $region3
    $region8: #{tpu_custom_call.1} parent=1 // loop_exit
      _
    %1287 = vsyncpa [#allocation6], 1
    %s1288 = scalar_lea.sflag [#allocation6], 1
    %1289 = vsyncpa %s1288, 1
    %1290 = vsyncpa [#allocation7], 1
    %s1291 = scalar_lea.sflag [#allocation7], 1
    %1292 = vsyncpa %s1291, 1
    %1293 = vsyncpa [#allocation10], 1

</llo_original>
